<compile_context>
chip_gen: v7x
topology: tpu7x:2x2x1
jax: 0.10.0
libtpu: 0.0.40
codegen_flags: <defaults>
</compile_context>

<pallas_src>
import functools

import jax
import jax.numpy as jnp
from jax.experimental import pallas as pl
from jax.experimental.pallas import tpu as pltpu

DEFAULT_HIDDEN_UNITS = 128   # matches the PyTorch module
HEAD_PAD = 128               # every head's output padded to one full 128-lane block


# ----------------------------- Pallas kernel --------------------------------
def _fused_heads_kernel(x_ref, w1_ref, b1_ref, w2_ref, b2_ref, w3_ref, b3_ref,
                        mean_ref, term_ref, opt_ref, *, num_options):
    O, P = num_options, HEAD_PAD

    x = x_ref[...]                                            # (Bp, D) bf16

    def head(i):
        """Dense 3-layer MLP for head i: (Bp, D) -> (Bp, P) f32 pre-activation."""
        h1 = jnp.tanh(
            jnp.dot(x, w1_ref[i], preferred_element_type=jnp.float32)
            + b1_ref[i])                                      # (Bp, H) f32
        h2 = jnp.tanh(
            jnp.dot(h1.astype(jnp.bfloat16), w2_ref[i],
                    preferred_element_type=jnp.float32)
            + b2_ref[i])                                      # (Bp, H) f32
        return (jnp.dot(h2.astype(jnp.bfloat16), w3_ref[i],
                        preferred_element_type=jnp.float32)
                + b3_ref[i])                                  # (Bp, P) f32

    # --- mean heads (0..O-1): tanh; each writes its own 128-lane slab --------
    for i in range(O):
        mean_ref[:, i * P:(i + 1) * P] = jnp.tanh(head(i))

    # --- termination heads (O..2O-1): stable sigmoid via EUP exp + vrcp ------
    for i in range(O):
        pre = head(O + i)
        e = jnp.exp(-jnp.abs(pre))
        r = pl.reciprocal(1.0 + e, approx=True)
        term_ref[:, i * P:(i + 1) * P] = jnp.where(pre >= 0.0, r, e * r)

    # --- policy-over-options head (2O): masked softmax over first O lanes ----
    pre = head(2 * O)
    lane = jax.lax.broadcasted_iota(jnp.int32, pre.shape, 1)
    logits = jnp.where(lane < O, pre, jnp.full_like(pre, -1e30))
    m = jnp.max(logits, axis=-1, keepdims=True)
    e = jnp.exp(logits - m)
    s = jnp.sum(e, axis=-1, keepdims=True)
    opt_ref[...] = e * pl.reciprocal(s, approx=True)          # padded lanes -> 0


def fused_heads(x, params, num_options):
    """Run every head over the batch in one kernel.

    Returns (mean_slab (B, O*128), term_slab (B, O*128), opt_probs (B, 128)),
    all f32 with final activations already applied.
    """
    B, D = x.shape
    O, P, H = num_options, HEAD_PAD, DEFAULT_HIDDEN_UNITS
    n_nets = 2 * O + 1

    Bp = -(-B // 16) * 16               # pad batch to the bf16 sublane pack (16 rows)
    xp = x.astype(jnp.bfloat16)         # single cast, then pad (no f32 round trip)
    if Bp != B:
        xp = jnp.pad(xp, ((0, Bp - B), (0, 0)))

    mean_out, term_out, opt_out = pl.pallas_call(
        functools.partial(_fused_heads_kernel, num_options=O),
        out_shape=(
            jax.ShapeDtypeStruct((Bp, O * P), jnp.float32),   # mean heads
            jax.ShapeDtypeStruct((Bp, O * P), jnp.float32),   # termination heads
            jax.ShapeDtypeStruct((Bp, P), jnp.float32),       # policy over options
        ),
        grid=(1,),
        in_specs=[
            pl.BlockSpec((Bp, D), lambda i: (0, 0)),              # x
            pl.BlockSpec((n_nets, D, H), lambda i: (0, 0, 0)),    # W1 (dense per head)
            pl.BlockSpec((n_nets, 1, H), lambda i: (0, 0, 0)),    # b1
            pl.BlockSpec((n_nets, H, H), lambda i: (0, 0, 0)),    # W2 (dense per head)
            pl.BlockSpec((n_nets, 1, H), lambda i: (0, 0, 0)),    # b2
            pl.BlockSpec((n_nets, H, P), lambda i: (0, 0, 0)),    # W3 (dense per head)
            pl.BlockSpec((n_nets, 1, P), lambda i: (0, 0, 0)),    # b3
        ],
        out_specs=(
            pl.BlockSpec((Bp, O * P), lambda i: (0, 0)),
            pl.BlockSpec((Bp, O * P), lambda i: (0, 0)),
            pl.BlockSpec((Bp, P), lambda i: (0, 0)),
        ),
        compiler_params=pltpu.CompilerParams(
            dimension_semantics=("arbitrary",),   # single TC; kernel is sub-us
        ),
    )(xp, params["W1"], params["b1"], params["W2"], params["b2"],
      params["W3"], params["b3"])

    return mean_out[:B], term_out[:B], opt_out[:B]


# ----------------------------- parameter init -------------------------------
def init_params(key, obs_dim, action_dim, num_options):
    """Orthogonal Linear weights, zero biases, zero `std` parameter — mirroring
    the PyTorch module — packed DENSELY per head for the kernel.

    Head order: [net_mean_0..net_mean_{O-1},
                 termination_0..termination_{O-1},
                 net_options]
    Weights are stored bf16 (MXU operands); biases / std stay f32.
    # TODO(synk): value_net (q_option) is unused by forward() and omitted from
    # the fused stack; add it back behind a flag if evaluate_* paths are needed.
    """
    H, P, O = DEFAULT_HIDDEN_UNITS, HEAD_PAD, num_options
    n_nets = 2 * O + 1
    out_dims = [action_dim] * O + [1] * O + [O]

    ortho = jax.nn.initializers.orthogonal()
    keys = jax.random.split(key, n_nets * 3)

    W1 = jnp.zeros((n_nets, obs_dim, H), jnp.float32)
    W2 = jnp.zeros((n_nets, H, H), jnp.float32)
    W3 = jnp.zeros((n_nets, H, P), jnp.float32)
    for i, od in enumerate(out_dims):
        k1, k2, k3 = keys[3 * i], keys[3 * i + 1], keys[3 * i + 2]
        W1 = W1.at[i].set(ortho(k1, (obs_dim, H), jnp.float32))
        W2 = W2.at[i].set(ortho(k2, (H, H), jnp.float32))
        W3 = W3.at[i, :, :od].set(ortho(k3, (H, od), jnp.float32))

    return dict(
        W1=W1.astype(jnp.bfloat16), b1=jnp.zeros((n_nets, 1, H), jnp.float32),
        W2=W2.astype(jnp.bfloat16), b2=jnp.zeros((n_nets, 1, H), jnp.float32),
        W3=W3.astype(jnp.bfloat16), b3=jnp.zeros((n_nets, 1, P), jnp.float32),
        std=jnp.zeros((O, action_dim), jnp.float32),   # per-option std parameter
    )


# ----------------------------- forward (glue) --------------------------------
def option_critic_forward(params, x, prev_option, is_init_state, worker_index,
                          num_options, action_dim, key):
    B = x.shape[0]
    O, A, P = num_options, action_dim, HEAD_PAD

    mean_slab, term_slab, opt_slab = fused_heads(x, params, O)

    mean = mean_slab.reshape(B, O, P)[:, :, :A]        # (B, O, A)  tanh'ed
    beta = term_slab.reshape(B, O, P)[:, :, 0]         # (B, O)     sigmoid'ed
    option_probs = opt_slab[:, :O]                     # (B, O)     softmax'ed

    std = jnp.broadcast_to(jax.nn.softplus(params["std"])[None], (B, O, A))

    mask = jnp.zeros((B, O), jnp.float32).at[worker_index, prev_option].set(1.0)
    init = jnp.broadcast_to(jnp.asarray(is_init_state).reshape(-1, 1), (B, O))
    pi_h = jnp.where(init, option_probs, beta * option_probs + (1.0 - beta) * mask)

    k1, k2 = jax.random.split(key)
    # clamp avoids log(0) -> all -inf rows (torch Categorical would also misbehave)
    option = jax.random.categorical(k1, jnp.log(jnp.clip(pi_h, 1e-30, None)), axis=-1)

    # matches torch: mean[worker_index, option] -> worker_index's per-option rows
    # indexed with batch-row i's sampled option.
    mean_sel = mean[worker_index][option]              # (B, A)
    std_sel = std[worker_index][option]                # (B, A)
    action = mean_sel + std_sel * jax.random.normal(k2, mean_sel.shape, jnp.float32)

    return action, beta, option


# --------------------------------- main --------------------------------------
if __name__ == "__main__":
    obs_dim, action_dim, num_options = 16, 4, 3
    batch, worker_index = 4, 0

    key = jax.random.PRNGKey(0)
    kp, kx, ks = jax.random.split(key, 3)

    params = init_params(kp, obs_dim, action_dim, num_options)
    x = jax.random.normal(kx, (batch, obs_dim), jnp.float32)
    prev_option = 1
    is_init_state = jnp.array([True, False, True, False])

    action, beta, option = option_critic_forward(
        params, x, prev_option, is_init_state, worker_index,
        num_options, action_dim, ks)

    jax.block_until_ready((action, beta, option))
    assert action.shape == (batch, action_dim)
    assert beta.shape == (batch, num_options)
    assert option.shape == (batch,)
    assert bool(jnp.all(jnp.isfinite(action)))
    assert bool(jnp.all((beta >= 0.0) & (beta <= 1.0)))
    assert bool(jnp.all((option >= 0) & (option < num_options)))
    print("KERNEL_OK")
</pallas_src>

<mosaic_0001>
module attributes {stable_mosaic.version = 11 : i64} {
  func.func @_fused_heads_kernel(%arg0: i32, %arg1: memref<16x16xbf16, #tpu.memory_space<vmem>>, %arg2: memref<7x16x128xbf16, #tpu.memory_space<vmem>>, %arg3: memref<7x1x128xf32, #tpu.memory_space<vmem>>, %arg4: memref<7x128x128xbf16, #tpu.memory_space<vmem>>, %arg5: memref<7x1x128xf32, #tpu.memory_space<vmem>>, %arg6: memref<7x128x128xbf16, #tpu.memory_space<vmem>>, %arg7: memref<7x1x128xf32, #tpu.memory_space<vmem>>, %arg8: memref<16x384xf32, #tpu.memory_space<vmem>>, %arg9: memref<16x384xf32, #tpu.memory_space<vmem>>, %arg10: memref<16x128xf32, #tpu.memory_space<vmem>>) attributes {dimension_semantics = [#tpu.dimension_semantics<arbitrary>], iteration_bounds = array<i64: 1>, scalar_prefetch = 0 : i64, scratch_operands = 0 : i64, tpu.core_type = #tpu.core_type<tc>, window_params = [{pipeline_mode = #tpu.pipeline_mode<synchronous>, transform_indices = @transform_0, window_bounds = array<i64: 16, 16>}, {pipeline_mode = #tpu.pipeline_mode<synchronous>, transform_indices = @transform_1, window_bounds = array<i64: 7, 16, 128>}, {pipeline_mode = #tpu.pipeline_mode<synchronous>, transform_indices = @transform_2, window_bounds = array<i64: 7, 1, 128>}, {pipeline_mode = #tpu.pipeline_mode<synchronous>, transform_indices = @transform_3, window_bounds = array<i64: 7, 128, 128>}, {pipeline_mode = #tpu.pipeline_mode<synchronous>, transform_indices = @transform_4, window_bounds = array<i64: 7, 1, 128>}, {pipeline_mode = #tpu.pipeline_mode<synchronous>, transform_indices = @transform_5, window_bounds = array<i64: 7, 128, 128>}, {pipeline_mode = #tpu.pipeline_mode<synchronous>, transform_indices = @transform_6, window_bounds = array<i64: 7, 1, 128>}, {pipeline_mode = #tpu.pipeline_mode<synchronous>, transform_indices = @transform_7, window_bounds = array<i64: 16, 384>}, {pipeline_mode = #tpu.pipeline_mode<synchronous>, transform_indices = @transform_8, window_bounds = array<i64: 16, 384>}, {pipeline_mode = #tpu.pipeline_mode<synchronous>, transform_indices = @transform_9, window_bounds = array<i64: 16, 128>}]} {
    %c0 = arith.constant 0 : index
    %c0_0 = arith.constant 0 : index
    %0 = vector.load %arg1[%c0, %c0_0] : memref<16x16xbf16, #tpu.memory_space<vmem>>, vector<16x16xbf16>
    %c0_1 = arith.constant 0 : index
    %c0_2 = arith.constant 0 : index
    %c0_3 = arith.constant 0 : index
    %1 = vector.load %arg2[%c0_1, %c0_2, %c0_3] : memref<7x16x128xbf16, #tpu.memory_space<vmem>>, vector<1x16x128xbf16>
    %2 = vector.shape_cast %1 : vector<1x16x128xbf16> to vector<16x128xbf16>
    %cst = arith.constant dense<0.000000e+00> : vector<16x128xf32>
    %3 = tpu.matmul %0, %2, %cst {dimension_numbers = #tpu.dot_dimension_numbers<[1], [0], [0], [1], [0, 0, 1, 1], [], []>} : vector<16x16xbf16>, vector<16x128xbf16>, vector<16x128xf32> -> vector<16x128xf32>
    %c0_4 = arith.constant 0 : index
    %c0_5 = arith.constant 0 : index
    %c0_6 = arith.constant 0 : index
    %4 = vector.load %arg3[%c0_4, %c0_5, %c0_6] : memref<7x1x128xf32, #tpu.memory_space<vmem>>, vector<1x1x128xf32>
    %5 = vector.shape_cast %4 : vector<1x1x128xf32> to vector<1x128xf32>
    %6 = vector.broadcast %5 : vector<1x128xf32> to vector<16x128xf32>
    %7 = arith.addf %3, %6 : vector<16x128xf32>
    %8 = math.tanh %7 : vector<16x128xf32>
    %9 = arith.truncf %8 : vector<16x128xf32> to vector<16x128xbf16>
    %c0_7 = arith.constant 0 : index
    %c0_8 = arith.constant 0 : index
    %c0_9 = arith.constant 0 : index
    %10 = vector.load %arg4[%c0_7, %c0_8, %c0_9] : memref<7x128x128xbf16, #tpu.memory_space<vmem>>, vector<1x128x128xbf16>
    %11 = vector.shape_cast %10 : vector<1x128x128xbf16> to vector<128x128xbf16>
    %cst_10 = arith.constant dense<0.000000e+00> : vector<16x128xf32>
    %12 = tpu.matmul %9, %11, %cst_10 {dimension_numbers = #tpu.dot_dimension_numbers<[1], [0], [0], [1], [0, 0, 1, 1], [], []>} : vector<16x128xbf16>, vector<128x128xbf16>, vector<16x128xf32> -> vector<16x128xf32>
    %c0_11 = arith.constant 0 : index
    %c0_12 = arith.constant 0 : index
    %c0_13 = arith.constant 0 : index
    %13 = vector.load %arg5[%c0_11, %c0_12, %c0_13] : memref<7x1x128xf32, #tpu.memory_space<vmem>>, vector<1x1x128xf32>
    %14 = vector.shape_cast %13 : vector<1x1x128xf32> to vector<1x128xf32>
    %15 = vector.broadcast %14 : vector<1x128xf32> to vector<16x128xf32>
    %16 = arith.addf %12, %15 : vector<16x128xf32>
    %17 = math.tanh %16 : vector<16x128xf32>
    %18 = arith.truncf %17 : vector<16x128xf32> to vector<16x128xbf16>
    %c0_14 = arith.constant 0 : index
    %c0_15 = arith.constant 0 : index
    %c0_16 = arith.constant 0 : index
    %19 = vector.load %arg6[%c0_14, %c0_15, %c0_16] : memref<7x128x128xbf16, #tpu.memory_space<vmem>>, vector<1x128x128xbf16>
    %20 = vector.shape_cast %19 : vector<1x128x128xbf16> to vector<128x128xbf16>
    %cst_17 = arith.constant dense<0.000000e+00> : vector<16x128xf32>
    %21 = tpu.matmul %18, %20, %cst_17 {dimension_numbers = #tpu.dot_dimension_numbers<[1], [0], [0], [1], [0, 0, 1, 1], [], []>} : vector<16x128xbf16>, vector<128x128xbf16>, vector<16x128xf32> -> vector<16x128xf32>
    %c0_18 = arith.constant 0 : index
    %c0_19 = arith.constant 0 : index
    %c0_20 = arith.constant 0 : index
    %22 = vector.load %arg7[%c0_18, %c0_19, %c0_20] : memref<7x1x128xf32, #tpu.memory_space<vmem>>, vector<1x1x128xf32>
    %23 = vector.shape_cast %22 : vector<1x1x128xf32> to vector<1x128xf32>
    %24 = vector.broadcast %23 : vector<1x128xf32> to vector<16x128xf32>
    %25 = arith.addf %21, %24 : vector<16x128xf32>
    %26 = math.tanh %25 : vector<16x128xf32>
    %c0_21 = arith.constant 0 : index
    %c0_22 = arith.constant 0 : index
    %27 = vector.load %arg8[%c0_21, %c0_22] : memref<16x384xf32, #tpu.memory_space<vmem>>, vector<16x128xf32>
    tpu.vector_store %arg8[%c0_21, %c0_22], %26 {strides = array<i32>} : memref<16x384xf32, #tpu.memory_space<vmem>>, vector<16x128xf32>,
    %c1 = arith.constant 1 : index
    %c0_23 = arith.constant 0 : index
    %c0_24 = arith.constant 0 : index
    %28 = vector.load %arg2[%c1, %c0_23, %c0_24] : memref<7x16x128xbf16, #tpu.memory_space<vmem>>, vector<1x16x128xbf16>
    %29 = vector.shape_cast %28 : vector<1x16x128xbf16> to vector<16x128xbf16>
    %cst_25 = arith.constant dense<0.000000e+00> : vector<16x128xf32>
    %30 = tpu.matmul %0, %29, %cst_25 {dimension_numbers = #tpu.dot_dimension_numbers<[1], [0], [0], [1], [0, 0, 1, 1], [], []>} : vector<16x16xbf16>, vector<16x128xbf16>, vector<16x128xf32> -> vector<16x128xf32>
    %c1_26 = arith.constant 1 : index
    %c0_27 = arith.constant 0 : index
    %c0_28 = arith.constant 0 : index
    %31 = vector.load %arg3[%c1_26, %c0_27, %c0_28] : memref<7x1x128xf32, #tpu.memory_space<vmem>>, vector<1x1x128xf32>
    %32 = vector.shape_cast %31 : vector<1x1x128xf32> to vector<1x128xf32>
    %33 = vector.broadcast %32 : vector<1x128xf32> to vector<16x128xf32>
    %34 = arith.addf %30, %33 : vector<16x128xf32>
    %35 = math.tanh %34 : vector<16x128xf32>
    %36 = arith.truncf %35 : vector<16x128xf32> to vector<16x128xbf16>
    %c1_29 = arith.constant 1 : index
    %c0_30 = arith.constant 0 : index
    %c0_31 = arith.constant 0 : index
    %37 = vector.load %arg4[%c1_29, %c0_30, %c0_31] : memref<7x128x128xbf16, #tpu.memory_space<vmem>>, vector<1x128x128xbf16>
    %38 = vector.shape_cast %37 : vector<1x128x128xbf16> to vector<128x128xbf16>
    %cst_32 = arith.constant dense<0.000000e+00> : vector<16x128xf32>
    %39 = tpu.matmul %36, %38, %cst_32 {dimension_numbers = #tpu.dot_dimension_numbers<[1], [0], [0], [1], [0, 0, 1, 1], [], []>} : vector<16x128xbf16>, vector<128x128xbf16>, vector<16x128xf32> -> vector<16x128xf32>
    %c1_33 = arith.constant 1 : index
    %c0_34 = arith.constant 0 : index
    %c0_35 = arith.constant 0 : index
    %40 = vector.load %arg5[%c1_33, %c0_34, %c0_35] : memref<7x1x128xf32, #tpu.memory_space<vmem>>, vector<1x1x128xf32>
    %41 = vector.shape_cast %40 : vector<1x1x128xf32> to vector<1x128xf32>
    %42 = vector.broadcast %41 : vector<1x128xf32> to vector<16x128xf32>
    %43 = arith.addf %39, %42 : vector<16x128xf32>
    %44 = math.tanh %43 : vector<16x128xf32>
    %45 = arith.truncf %44 : vector<16x128xf32> to vector<16x128xbf16>
    %c1_36 = arith.constant 1 : index
    %c0_37 = arith.constant 0 : index
    %c0_38 = arith.constant 0 : index
    %46 = vector.load %arg6[%c1_36, %c0_37, %c0_38] : memref<7x128x128xbf16, #tpu.memory_space<vmem>>, vector<1x128x128xbf16>
    %47 = vector.shape_cast %46 : vector<1x128x128xbf16> to vector<128x128xbf16>
    %cst_39 = arith.constant dense<0.000000e+00> : vector<16x128xf32>
    %48 = tpu.matmul %45, %47, %cst_39 {dimension_numbers = #tpu.dot_dimension_numbers<[1], [0], [0], [1], [0, 0, 1, 1], [], []>} : vector<16x128xbf16>, vector<128x128xbf16>, vector<16x128xf32> -> vector<16x128xf32>
    %c1_40 = arith.constant 1 : index
    %c0_41 = arith.constant 0 : index
    %c0_42 = arith.constant 0 : index
    %49 = vector.load %arg7[%c1_40, %c0_41, %c0_42] : memref<7x1x128xf32, #tpu.memory_space<vmem>>, vector<1x1x128xf32>
    %50 = vector.shape_cast %49 : vector<1x1x128xf32> to vector<1x128xf32>
    %51 = vector.broadcast %50 : vector<1x128xf32> to vector<16x128xf32>
    %52 = arith.addf %48, %51 : vector<16x128xf32>
    %53 = math.tanh %52 : vector<16x128xf32>
    %c0_43 = arith.constant 0 : index
    %c128 = arith.constant 128 : index
    %54 = vector.load %arg8[%c0_43, %c128] : memref<16x384xf32, #tpu.memory_space<vmem>>, vector<16x128xf32>
    tpu.vector_store %arg8[%c0_43, %c128], %53 {strides = array<i32>} : memref<16x384xf32, #tpu.memory_space<vmem>>, vector<16x128xf32>,
    %c2 = arith.constant 2 : index
    %c0_44 = arith.constant 0 : index
    %c0_45 = arith.constant 0 : index
    %55 = vector.load %arg2[%c2, %c0_44, %c0_45] : memref<7x16x128xbf16, #tpu.memory_space<vmem>>, vector<1x16x128xbf16>
    %56 = vector.shape_cast %55 : vector<1x16x128xbf16> to vector<16x128xbf16>
    %cst_46 = arith.constant dense<0.000000e+00> : vector<16x128xf32>
    %57 = tpu.matmul %0, %56, %cst_46 {dimension_numbers = #tpu.dot_dimension_numbers<[1], [0], [0], [1], [0, 0, 1, 1], [], []>} : vector<16x16xbf16>, vector<16x128xbf16>, vector<16x128xf32> -> vector<16x128xf32>
    %c2_47 = arith.constant 2 : index
    %c0_48 = arith.constant 0 : index
    %c0_49 = arith.constant 0 : index
    %58 = vector.load %arg3[%c2_47, %c0_48, %c0_49] : memref<7x1x128xf32, #tpu.memory_space<vmem>>, vector<1x1x128xf32>
    %59 = vector.shape_cast %58 : vector<1x1x128xf32> to vector<1x128xf32>
    %60 = vector.broadcast %59 : vector<1x128xf32> to vector<16x128xf32>
    %61 = arith.addf %57, %60 : vector<16x128xf32>
    %62 = math.tanh %61 : vector<16x128xf32>
    %63 = arith.truncf %62 : vector<16x128xf32> to vector<16x128xbf16>
    %c2_50 = arith.constant 2 : index
    %c0_51 = arith.constant 0 : index
    %c0_52 = arith.constant 0 : index
    %64 = vector.load %arg4[%c2_50, %c0_51, %c0_52] : memref<7x128x128xbf16, #tpu.memory_space<vmem>>, vector<1x128x128xbf16>
    %65 = vector.shape_cast %64 : vector<1x128x128xbf16> to vector<128x128xbf16>
    %cst_53 = arith.constant dense<0.000000e+00> : vector<16x128xf32>
    %66 = tpu.matmul %63, %65, %cst_53 {dimension_numbers = #tpu.dot_dimension_numbers<[1], [0], [0], [1], [0, 0, 1, 1], [], []>} : vector<16x128xbf16>, vector<128x128xbf16>, vector<16x128xf32> -> vector<16x128xf32>
    %c2_54 = arith.constant 2 : index
    %c0_55 = arith.constant 0 : index
    %c0_56 = arith.constant 0 : index
    %67 = vector.load %arg5[%c2_54, %c0_55, %c0_56] : memref<7x1x128xf32, #tpu.memory_space<vmem>>, vector<1x1x128xf32>
    %68 = vector.shape_cast %67 : vector<1x1x128xf32> to vector<1x128xf32>
    %69 = vector.broadcast %68 : vector<1x128xf32> to vector<16x128xf32>
    %70 = arith.addf %66, %69 : vector<16x128xf32>
    %71 = math.tanh %70 : vector<16x128xf32>
    %72 = arith.truncf %71 : vector<16x128xf32> to vector<16x128xbf16>
    %c2_57 = arith.constant 2 : index
    %c0_58 = arith.constant 0 : index
    %c0_59 = arith.constant 0 : index
    %73 = vector.load %arg6[%c2_57, %c0_58, %c0_59] : memref<7x128x128xbf16, #tpu.memory_space<vmem>>, vector<1x128x128xbf16>
    %74 = vector.shape_cast %73 : vector<1x128x128xbf16> to vector<128x128xbf16>
    %cst_60 = arith.constant dense<0.000000e+00> : vector<16x128xf32>
    %75 = tpu.matmul %72, %74, %cst_60 {dimension_numbers = #tpu.dot_dimension_numbers<[1], [0], [0], [1], [0, 0, 1, 1], [], []>} : vector<16x128xbf16>, vector<128x128xbf16>, vector<16x128xf32> -> vector<16x128xf32>
    %c2_61 = arith.constant 2 : index
    %c0_62 = arith.constant 0 : index
    %c0_63 = arith.constant 0 : index
    %76 = vector.load %arg7[%c2_61, %c0_62, %c0_63] : memref<7x1x128xf32, #tpu.memory_space<vmem>>, vector<1x1x128xf32>
    %77 = vector.shape_cast %76 : vector<1x1x128xf32> to vector<1x128xf32>
    %78 = vector.broadcast %77 : vector<1x128xf32> to vector<16x128xf32>
    %79 = arith.addf %75, %78 : vector<16x128xf32>
    %80 = math.tanh %79 : vector<16x128xf32>
    %c0_64 = arith.constant 0 : index
    %c256 = arith.constant 256 : index
    %81 = vector.load %arg8[%c0_64, %c256] : memref<16x384xf32, #tpu.memory_space<vmem>>, vector<16x128xf32>
    tpu.vector_store %arg8[%c0_64, %c256], %80 {strides = array<i32>} : memref<16x384xf32, #tpu.memory_space<vmem>>, vector<16x128xf32>,
    %c3 = arith.constant 3 : index
    %c0_65 = arith.constant 0 : index
    %c0_66 = arith.constant 0 : index
    %82 = vector.load %arg2[%c3, %c0_65, %c0_66] : memref<7x16x128xbf16, #tpu.memory_space<vmem>>, vector<1x16x128xbf16>
    %83 = vector.shape_cast %82 : vector<1x16x128xbf16> to vector<16x128xbf16>
    %cst_67 = arith.constant dense<0.000000e+00> : vector<16x128xf32>
    %84 = tpu.matmul %0, %83, %cst_67 {dimension_numbers = #tpu.dot_dimension_numbers<[1], [0], [0], [1], [0, 0, 1, 1], [], []>} : vector<16x16xbf16>, vector<16x128xbf16>, vector<16x128xf32> -> vector<16x128xf32>
    %c3_68 = arith.constant 3 : index
    %c0_69 = arith.constant 0 : index
    %c0_70 = arith.constant 0 : index
    %85 = vector.load %arg3[%c3_68, %c0_69, %c0_70] : memref<7x1x128xf32, #tpu.memory_space<vmem>>, vector<1x1x128xf32>
    %86 = vector.shape_cast %85 : vector<1x1x128xf32> to vector<1x128xf32>
    %87 = vector.broadcast %86 : vector<1x128xf32> to vector<16x128xf32>
    %88 = arith.addf %84, %87 : vector<16x128xf32>
    %89 = math.tanh %88 : vector<16x128xf32>
    %90 = arith.truncf %89 : vector<16x128xf32> to vector<16x128xbf16>
    %c3_71 = arith.constant 3 : index
    %c0_72 = arith.constant 0 : index
    %c0_73 = arith.constant 0 : index
    %91 = vector.load %arg4[%c3_71, %c0_72, %c0_73] : memref<7x128x128xbf16, #tpu.memory_space<vmem>>, vector<1x128x128xbf16>
    %92 = vector.shape_cast %91 : vector<1x128x128xbf16> to vector<128x128xbf16>
    %cst_74 = arith.constant dense<0.000000e+00> : vector<16x128xf32>
    %93 = tpu.matmul %90, %92, %cst_74 {dimension_numbers = #tpu.dot_dimension_numbers<[1], [0], [0], [1], [0, 0, 1, 1], [], []>} : vector<16x128xbf16>, vector<128x128xbf16>, vector<16x128xf32> -> vector<16x128xf32>
    %c3_75 = arith.constant 3 : index
    %c0_76 = arith.constant 0 : index
    %c0_77 = arith.constant 0 : index
    %94 = vector.load %arg5[%c3_75, %c0_76, %c0_77] : memref<7x1x128xf32, #tpu.memory_space<vmem>>, vector<1x1x128xf32>
    %95 = vector.shape_cast %94 : vector<1x1x128xf32> to vector<1x128xf32>
    %96 = vector.broadcast %95 : vector<1x128xf32> to vector<16x128xf32>
    %97 = arith.addf %93, %96 : vector<16x128xf32>
    %98 = math.tanh %97 : vector<16x128xf32>
    %99 = arith.truncf %98 : vector<16x128xf32> to vector<16x128xbf16>
    %c3_78 = arith.constant 3 : index
    %c0_79 = arith.constant 0 : index
    %c0_80 = arith.constant 0 : index
    %100 = vector.load %arg6[%c3_78, %c0_79, %c0_80] : memref<7x128x128xbf16, #tpu.memory_space<vmem>>, vector<1x128x128xbf16>
    %101 = vector.shape_cast %100 : vector<1x128x128xbf16> to vector<128x128xbf16>
    %cst_81 = arith.constant dense<0.000000e+00> : vector<16x128xf32>
    %102 = tpu.matmul %99, %101, %cst_81 {dimension_numbers = #tpu.dot_dimension_numbers<[1], [0], [0], [1], [0, 0, 1, 1], [], []>} : vector<16x128xbf16>, vector<128x128xbf16>, vector<16x128xf32> -> vector<16x128xf32>
    %c3_82 = arith.constant 3 : index
    %c0_83 = arith.constant 0 : index
    %c0_84 = arith.constant 0 : index
    %103 = vector.load %arg7[%c3_82, %c0_83, %c0_84] : memref<7x1x128xf32, #tpu.memory_space<vmem>>, vector<1x1x128xf32>
    %104 = vector.shape_cast %103 : vector<1x1x128xf32> to vector<1x128xf32>
    %105 = vector.broadcast %104 : vector<1x128xf32> to vector<16x128xf32>
    %106 = arith.addf %102, %105 : vector<16x128xf32>
    %107 = math.absf %106 : vector<16x128xf32>
    %cst_85 = arith.constant 0.000000e+00 : f32
    %108 = vector.broadcast %cst_85 : f32 to vector<16x128xf32>
    %109 = arith.subf %108, %107 : vector<16x128xf32>
    %110 = math.exp %109 : vector<16x128xf32>
    %cst_86 = arith.constant 1.000000e+00 : f32
    %111 = vector.broadcast %cst_86 : f32 to vector<16x128xf32>
    %112 = arith.addf %111, %110 : vector<16x128xf32>
    %113 = tpu.reciprocal %112 {approx = true} : vector<16x128xf32> -> vector<16x128xf32>
    %cst_87 = arith.constant 0.000000e+00 : f32
    %114 = vector.broadcast %cst_87 : f32 to vector<16x128xf32>
    %115 = arith.cmpf oge, %106, %114 : vector<16x128xf32>
    %116 = arith.mulf %110, %113 : vector<16x128xf32>
    %117 = arith.select %115, %113, %116 : vector<16x128xi1>, vector<16x128xf32>
    %c0_88 = arith.constant 0 : index
    %c0_89 = arith.constant 0 : index
    %118 = vector.load %arg9[%c0_88, %c0_89] : memref<16x384xf32, #tpu.memory_space<vmem>>, vector<16x128xf32>
    tpu.vector_store %arg9[%c0_88, %c0_89], %117 {strides = array<i32>} : memref<16x384xf32, #tpu.memory_space<vmem>>, vector<16x128xf32>,
    %c4 = arith.constant 4 : index
    %c0_90 = arith.constant 0 : index
    %c0_91 = arith.constant 0 : index
    %119 = vector.load %arg2[%c4, %c0_90, %c0_91] : memref<7x16x128xbf16, #tpu.memory_space<vmem>>, vector<1x16x128xbf16>
    %120 = vector.shape_cast %119 : vector<1x16x128xbf16> to vector<16x128xbf16>
    %cst_92 = arith.constant dense<0.000000e+00> : vector<16x128xf32>
    %121 = tpu.matmul %0, %120, %cst_92 {dimension_numbers = #tpu.dot_dimension_numbers<[1], [0], [0], [1], [0, 0, 1, 1], [], []>} : vector<16x16xbf16>, vector<16x128xbf16>, vector<16x128xf32> -> vector<16x128xf32>
    %c4_93 = arith.constant 4 : index
    %c0_94 = arith.constant 0 : index
    %c0_95 = arith.constant 0 : index
    %122 = vector.load %arg3[%c4_93, %c0_94, %c0_95] : memref<7x1x128xf32, #tpu.memory_space<vmem>>, vector<1x1x128xf32>
    %123 = vector.shape_cast %122 : vector<1x1x128xf32> to vector<1x128xf32>
    %124 = vector.broadcast %123 : vector<1x128xf32> to vector<16x128xf32>
    %125 = arith.addf %121, %124 : vector<16x128xf32>
    %126 = math.tanh %125 : vector<16x128xf32>
    %127 = arith.truncf %126 : vector<16x128xf32> to vector<16x128xbf16>
    %c4_96 = arith.constant 4 : index
    %c0_97 = arith.constant 0 : index
    %c0_98 = arith.constant 0 : index
    %128 = vector.load %arg4[%c4_96, %c0_97, %c0_98] : memref<7x128x128xbf16, #tpu.memory_space<vmem>>, vector<1x128x128xbf16>
    %129 = vector.shape_cast %128 : vector<1x128x128xbf16> to vector<128x128xbf16>
    %cst_99 = arith.constant dense<0.000000e+00> : vector<16x128xf32>
    %130 = tpu.matmul %127, %129, %cst_99 {dimension_numbers = #tpu.dot_dimension_numbers<[1], [0], [0], [1], [0, 0, 1, 1], [], []>} : vector<16x128xbf16>, vector<128x128xbf16>, vector<16x128xf32> -> vector<16x128xf32>
    %c4_100 = arith.constant 4 : index
    %c0_101 = arith.constant 0 : index
    %c0_102 = arith.constant 0 : index
    %131 = vector.load %arg5[%c4_100, %c0_101, %c0_102] : memref<7x1x128xf32, #tpu.memory_space<vmem>>, vector<1x1x128xf32>
    %132 = vector.shape_cast %131 : vector<1x1x128xf32> to vector<1x128xf32>
    %133 = vector.broadcast %132 : vector<1x128xf32> to vector<16x128xf32>
    %134 = arith.addf %130, %133 : vector<16x128xf32>
    %135 = math.tanh %134 : vector<16x128xf32>
    %136 = arith.truncf %135 : vector<16x128xf32> to vector<16x128xbf16>
    %c4_103 = arith.constant 4 : index
    %c0_104 = arith.constant 0 : index
    %c0_105 = arith.constant 0 : index
    %137 = vector.load %arg6[%c4_103, %c0_104, %c0_105] : memref<7x128x128xbf16, #tpu.memory_space<vmem>>, vector<1x128x128xbf16>
    %138 = vector.shape_cast %137 : vector<1x128x128xbf16> to vector<128x128xbf16>
    %cst_106 = arith.constant dense<0.000000e+00> : vector<16x128xf32>
    %139 = tpu.matmul %136, %138, %cst_106 {dimension_numbers = #tpu.dot_dimension_numbers<[1], [0], [0], [1], [0, 0, 1, 1], [], []>} : vector<16x128xbf16>, vector<128x128xbf16>, vector<16x128xf32> -> vector<16x128xf32>
    %c4_107 = arith.constant 4 : index
    %c0_108 = arith.constant 0 : index
    %c0_109 = arith.constant 0 : index
    %140 = vector.load %arg7[%c4_107, %c0_108, %c0_109] : memref<7x1x128xf32, #tpu.memory_space<vmem>>, vector<1x1x128xf32>
    %141 = vector.shape_cast %140 : vector<1x1x128xf32> to vector<1x128xf32>
    %142 = vector.broadcast %141 : vector<1x128xf32> to vector<16x128xf32>
    %143 = arith.addf %139, %142 : vector<16x128xf32>
    %144 = math.absf %143 : vector<16x128xf32>
    %cst_110 = arith.constant 0.000000e+00 : f32
    %145 = vector.broadcast %cst_110 : f32 to vector<16x128xf32>
    %146 = arith.subf %145, %144 : vector<16x128xf32>
    %147 = math.exp %146 : vector<16x128xf32>
    %cst_111 = arith.constant 1.000000e+00 : f32
    %148 = vector.broadcast %cst_111 : f32 to vector<16x128xf32>
    %149 = arith.addf %148, %147 : vector<16x128xf32>
    %150 = tpu.reciprocal %149 {approx = true} : vector<16x128xf32> -> vector<16x128xf32>
    %cst_112 = arith.constant 0.000000e+00 : f32
    %151 = vector.broadcast %cst_112 : f32 to vector<16x128xf32>
    %152 = arith.cmpf oge, %143, %151 : vector<16x128xf32>
    %153 = arith.mulf %147, %150 : vector<16x128xf32>
    %154 = arith.select %152, %150, %153 : vector<16x128xi1>, vector<16x128xf32>
    %c0_113 = arith.constant 0 : index
    %c128_114 = arith.constant 128 : index
    %155 = vector.load %arg9[%c0_113, %c128_114] : memref<16x384xf32, #tpu.memory_space<vmem>>, vector<16x128xf32>
    tpu.vector_store %arg9[%c0_113, %c128_114], %154 {strides = array<i32>} : memref<16x384xf32, #tpu.memory_space<vmem>>, vector<16x128xf32>,
    %c5 = arith.constant 5 : index
    %c0_115 = arith.constant 0 : index
    %c0_116 = arith.constant 0 : index
    %156 = vector.load %arg2[%c5, %c0_115, %c0_116] : memref<7x16x128xbf16, #tpu.memory_space<vmem>>, vector<1x16x128xbf16>
    %157 = vector.shape_cast %156 : vector<1x16x128xbf16> to vector<16x128xbf16>
    %cst_117 = arith.constant dense<0.000000e+00> : vector<16x128xf32>
    %158 = tpu.matmul %0, %157, %cst_117 {dimension_numbers = #tpu.dot_dimension_numbers<[1], [0], [0], [1], [0, 0, 1, 1], [], []>} : vector<16x16xbf16>, vector<16x128xbf16>, vector<16x128xf32> -> vector<16x128xf32>
    %c5_118 = arith.constant 5 : index
    %c0_119 = arith.constant 0 : index
    %c0_120 = arith.constant 0 : index
    %159 = vector.load %arg3[%c5_118, %c0_119, %c0_120] : memref<7x1x128xf32, #tpu.memory_space<vmem>>, vector<1x1x128xf32>
    %160 = vector.shape_cast %159 : vector<1x1x128xf32> to vector<1x128xf32>
    %161 = vector.broadcast %160 : vector<1x128xf32> to vector<16x128xf32>
    %162 = arith.addf %158, %161 : vector<16x128xf32>
    %163 = math.tanh %162 : vector<16x128xf32>
    %164 = arith.truncf %163 : vector<16x128xf32> to vector<16x128xbf16>
    %c5_121 = arith.constant 5 : index
    %c0_122 = arith.constant 0 : index
    %c0_123 = arith.constant 0 : index
    %165 = vector.load %arg4[%c5_121, %c0_122, %c0_123] : memref<7x128x128xbf16, #tpu.memory_space<vmem>>, vector<1x128x128xbf16>
    %166 = vector.shape_cast %165 : vector<1x128x128xbf16> to vector<128x128xbf16>
    %cst_124 = arith.constant dense<0.000000e+00> : vector<16x128xf32>
    %167 = tpu.matmul %164, %166, %cst_124 {dimension_numbers = #tpu.dot_dimension_numbers<[1], [0], [0], [1], [0, 0, 1, 1], [], []>} : vector<16x128xbf16>, vector<128x128xbf16>, vector<16x128xf32> -> vector<16x128xf32>
    %c5_125 = arith.constant 5 : index
    %c0_126 = arith.constant 0 : index
    %c0_127 = arith.constant 0 : index
    %168 = vector.load %arg5[%c5_125, %c0_126, %c0_127] : memref<7x1x128xf32, #tpu.memory_space<vmem>>, vector<1x1x128xf32>
    %169 = vector.shape_cast %168 : vector<1x1x128xf32> to vector<1x128xf32>
    %170 = vector.broadcast %169 : vector<1x128xf32> to vector<16x128xf32>
    %171 = arith.addf %167, %170 : vector<16x128xf32>
    %172 = math.tanh %171 : vector<16x128xf32>
    %173 = arith.truncf %172 : vector<16x128xf32> to vector<16x128xbf16>
    %c5_128 = arith.constant 5 : index
    %c0_129 = arith.constant 0 : index
    %c0_130 = arith.constant 0 : index
    %174 = vector.load %arg6[%c5_128, %c0_129, %c0_130] : memref<7x128x128xbf16, #tpu.memory_space<vmem>>, vector<1x128x128xbf16>
    %175 = vector.shape_cast %174 : vector<1x128x128xbf16> to vector<128x128xbf16>
    %cst_131 = arith.constant dense<0.000000e+00> : vector<16x128xf32>
    %176 = tpu.matmul %173, %175, %cst_131 {dimension_numbers = #tpu.dot_dimension_numbers<[1], [0], [0], [1], [0, 0, 1, 1], [], []>} : vector<16x128xbf16>, vector<128x128xbf16>, vector<16x128xf32> -> vector<16x128xf32>
    %c5_132 = arith.constant 5 : index
    %c0_133 = arith.constant 0 : index
    %c0_134 = arith.constant 0 : index
    %177 = vector.load %arg7[%c5_132, %c0_133, %c0_134] : memref<7x1x128xf32, #tpu.memory_space<vmem>>, vector<1x1x128xf32>
    %178 = vector.shape_cast %177 : vector<1x1x128xf32> to vector<1x128xf32>
    %179 = vector.broadcast %178 : vector<1x128xf32> to vector<16x128xf32>
    %180 = arith.addf %176, %179 : vector<16x128xf32>
    %181 = math.absf %180 : vector<16x128xf32>
    %cst_135 = arith.constant 0.000000e+00 : f32
    %182 = vector.broadcast %cst_135 : f32 to vector<16x128xf32>
    %183 = arith.subf %182, %181 : vector<16x128xf32>
    %184 = math.exp %183 : vector<16x128xf32>
    %cst_136 = arith.constant 1.000000e+00 : f32
    %185 = vector.broadcast %cst_136 : f32 to vector<16x128xf32>
    %186 = arith.addf %185, %184 : vector<16x128xf32>
    %187 = tpu.reciprocal %186 {approx = true} : vector<16x128xf32> -> vector<16x128xf32>
    %cst_137 = arith.constant 0.000000e+00 : f32
    %188 = vector.broadcast %cst_137 : f32 to vector<16x128xf32>
    %189 = arith.cmpf oge, %180, %188 : vector<16x128xf32>
    %190 = arith.mulf %184, %187 : vector<16x128xf32>
    %191 = arith.select %189, %187, %190 : vector<16x128xi1>, vector<16x128xf32>
    %c0_138 = arith.constant 0 : index
    %c256_139 = arith.constant 256 : index
    %192 = vector.load %arg9[%c0_138, %c256_139] : memref<16x384xf32, #tpu.memory_space<vmem>>, vector<16x128xf32>
    tpu.vector_store %arg9[%c0_138, %c256_139], %191 {strides = array<i32>} : memref<16x384xf32, #tpu.memory_space<vmem>>, vector<16x128xf32>,
    %c6 = arith.constant 6 : index
    %c0_140 = arith.constant 0 : index
    %c0_141 = arith.constant 0 : index
    %193 = vector.load %arg2[%c6, %c0_140, %c0_141] : memref<7x16x128xbf16, #tpu.memory_space<vmem>>, vector<1x16x128xbf16>
    %194 = vector.shape_cast %193 : vector<1x16x128xbf16> to vector<16x128xbf16>
    %cst_142 = arith.constant dense<0.000000e+00> : vector<16x128xf32>
    %195 = tpu.matmul %0, %194, %cst_142 {dimension_numbers = #tpu.dot_dimension_numbers<[1], [0], [0], [1], [0, 0, 1, 1], [], []>} : vector<16x16xbf16>, vector<16x128xbf16>, vector<16x128xf32> -> vector<16x128xf32>
    %c6_143 = arith.constant 6 : index
    %c0_144 = arith.constant 0 : index
    %c0_145 = arith.constant 0 : index
    %196 = vector.load %arg3[%c6_143, %c0_144, %c0_145] : memref<7x1x128xf32, #tpu.memory_space<vmem>>, vector<1x1x128xf32>
    %197 = vector.shape_cast %196 : vector<1x1x128xf32> to vector<1x128xf32>
    %198 = vector.broadcast %197 : vector<1x128xf32> to vector<16x128xf32>
    %199 = arith.addf %195, %198 : vector<16x128xf32>
    %200 = math.tanh %199 : vector<16x128xf32>
    %201 = arith.truncf %200 : vector<16x128xf32> to vector<16x128xbf16>
    %c6_146 = arith.constant 6 : index
    %c0_147 = arith.constant 0 : index
    %c0_148 = arith.constant 0 : index
    %202 = vector.load %arg4[%c6_146, %c0_147, %c0_148] : memref<7x128x128xbf16, #tpu.memory_space<vmem>>, vector<1x128x128xbf16>
    %203 = vector.shape_cast %202 : vector<1x128x128xbf16> to vector<128x128xbf16>
    %cst_149 = arith.constant dense<0.000000e+00> : vector<16x128xf32>
    %204 = tpu.matmul %201, %203, %cst_149 {dimension_numbers = #tpu.dot_dimension_numbers<[1], [0], [0], [1], [0, 0, 1, 1], [], []>} : vector<16x128xbf16>, vector<128x128xbf16>, vector<16x128xf32> -> vector<16x128xf32>
    %c6_150 = arith.constant 6 : index
    %c0_151 = arith.constant 0 : index
    %c0_152 = arith.constant 0 : index
    %205 = vector.load %arg5[%c6_150, %c0_151, %c0_152] : memref<7x1x128xf32, #tpu.memory_space<vmem>>, vector<1x1x128xf32>
    %206 = vector.shape_cast %205 : vector<1x1x128xf32> to vector<1x128xf32>
    %207 = vector.broadcast %206 : vector<1x128xf32> to vector<16x128xf32>
    %208 = arith.addf %204, %207 : vector<16x128xf32>
    %209 = math.tanh %208 : vector<16x128xf32>
    %210 = arith.truncf %209 : vector<16x128xf32> to vector<16x128xbf16>
    %c6_153 = arith.constant 6 : index
    %c0_154 = arith.constant 0 : index
    %c0_155 = arith.constant 0 : index
    %211 = vector.load %arg6[%c6_153, %c0_154, %c0_155] : memref<7x128x128xbf16, #tpu.memory_space<vmem>>, vector<1x128x128xbf16>
    %212 = vector.shape_cast %211 : vector<1x128x128xbf16> to vector<128x128xbf16>
    %cst_156 = arith.constant dense<0.000000e+00> : vector<16x128xf32>
    %213 = tpu.matmul %210, %212, %cst_156 {dimension_numbers = #tpu.dot_dimension_numbers<[1], [0], [0], [1], [0, 0, 1, 1], [], []>} : vector<16x128xbf16>, vector<128x128xbf16>, vector<16x128xf32> -> vector<16x128xf32>
    %c6_157 = arith.constant 6 : index
    %c0_158 = arith.constant 0 : index
    %c0_159 = arith.constant 0 : index
    %214 = vector.load %arg7[%c6_157, %c0_158, %c0_159] : memref<7x1x128xf32, #tpu.memory_space<vmem>>, vector<1x1x128xf32>
    %215 = vector.shape_cast %214 : vector<1x1x128xf32> to vector<1x128xf32>
    %216 = vector.broadcast %215 : vector<1x128xf32> to vector<16x128xf32>
    %217 = arith.addf %213, %216 : vector<16x128xf32>
    %218 = tpu.iota {dimensions = array<i32: 1>} : vector<16x128xi32>
    %c3_i32 = arith.constant 3 : i32
    %219 = vector.broadcast %c3_i32 : i32 to vector<16x128xi32>
    %220 = arith.cmpi slt, %218, %219 : vector<16x128xi32>
    %cst_160 = arith.constant -1.000000e+30 : f32
    %221 = vector.broadcast %cst_160 : f32 to vector<16x128xf32>
    %222 = arith.select %220, %217, %221 : vector<16x128xi1>, vector<16x128xf32>
    %cst_161 = arith.constant dense<0xFF800000> : vector<16xf32>
    %223 = vector.multi_reduction <maximumf>, %222, %cst_161 [1] : vector<16x128xf32> to vector<16xf32>
    %224 = vector.shape_cast %223 : vector<16xf32> to vector<16x1xf32>
    %225 = vector.broadcast %224 : vector<16x1xf32> to vector<16x128xf32>
    %226 = arith.subf %222, %225 : vector<16x128xf32>
    %227 = math.exp %226 : vector<16x128xf32>
    %cst_162 = arith.constant dense<0.000000e+00> : vector<16xf32>
    %228 = vector.multi_reduction <add>, %227, %cst_162 [1] : vector<16x128xf32> to vector<16xf32>
    %229 = vector.shape_cast %228 : vector<16xf32> to vector<16x1xf32>
    %230 = tpu.reciprocal %229 {approx = true} : vector<16x1xf32> -> vector<16x1xf32>
    %231 = vector.broadcast %230 : vector<16x1xf32> to vector<16x128xf32>
    %232 = arith.mulf %227, %231 : vector<16x128xf32>
    %c0_163 = arith.constant 0 : index
    %c0_164 = arith.constant 0 : index
    %233 = vector.load %arg10[%c0_163, %c0_164] : memref<16x128xf32, #tpu.memory_space<vmem>>, vector<16x128xf32>
    tpu.vector_store %arg10[%c0_163, %c0_164], %232 {strides = array<i32>} : memref<16x128xf32, #tpu.memory_space<vmem>>, vector<16x128xf32>,
    return
  }
  func.func @transform_0(%arg0: i32) -> (i32, i32) {
    %c0_i32 = arith.constant 0 : i32
    %c0_i32_0 = arith.constant 0 : i32
    %c0_i32_1 = arith.constant 0 : i32
    return %c0_i32, %c0_i32_0 : i32, i32
  }
  func.func @transform_1(%arg0: i32) -> (i32, i32, i32) {
    %c0_i32 = arith.constant 0 : i32
    %c0_i32_0 = arith.constant 0 : i32
    %c0_i32_1 = arith.constant 0 : i32
    %c0_i32_2 = arith.constant 0 : i32
    return %c0_i32, %c0_i32_0, %c0_i32_1 : i32, i32, i32
  }
  func.func @transform_2(%arg0: i32) -> (i32, i32, i32) {
    %c0_i32 = arith.constant 0 : i32
    %c0_i32_0 = arith.constant 0 : i32
    %c0_i32_1 = arith.constant 0 : i32
    %c0_i32_2 = arith.constant 0 : i32
    return %c0_i32, %c0_i32_0, %c0_i32_1 : i32, i32, i32
  }
  func.func @transform_3(%arg0: i32) -> (i32, i32, i32) {
    %c0_i32 = arith.constant 0 : i32
    %c0_i32_0 = arith.constant 0 : i32
    %c0_i32_1 = arith.constant 0 : i32
    %c0_i32_2 = arith.constant 0 : i32
    return %c0_i32, %c0_i32_0, %c0_i32_1 : i32, i32, i32
  }
  func.func @transform_4(%arg0: i32) -> (i32, i32, i32) {
    %c0_i32 = arith.constant 0 : i32
    %c0_i32_0 = arith.constant 0 : i32
    %c0_i32_1 = arith.constant 0 : i32
    %c0_i32_2 = arith.constant 0 : i32
    return %c0_i32, %c0_i32_0, %c0_i32_1 : i32, i32, i32
  }
  func.func @transform_5(%arg0: i32) -> (i32, i32, i32) {
    %c0_i32 = arith.constant 0 : i32
    %c0_i32_0 = arith.constant 0 : i32
    %c0_i32_1 = arith.constant 0 : i32
    %c0_i32_2 = arith.constant 0 : i32
    return %c0_i32, %c0_i32_0, %c0_i32_1 : i32, i32, i32
  }
  func.func @transform_6(%arg0: i32) -> (i32, i32, i32) {
    %c0_i32 = arith.constant 0 : i32
    %c0_i32_0 = arith.constant 0 : i32
    %c0_i32_1 = arith.constant 0 : i32
    %c0_i32_2 = arith.constant 0 : i32
    return %c0_i32, %c0_i32_0, %c0_i32_1 : i32, i32, i32
  }
  func.func @transform_7(%arg0: i32) -> (i32, i32) {
    %c0_i32 = arith.constant 0 : i32
    %c0_i32_0 = arith.constant 0 : i32
    %c0_i32_1 = arith.constant 0 : i32
    return %c0_i32, %c0_i32_0 : i32, i32
  }
  func.func @transform_8(%arg0: i32) -> (i32, i32) {
    %c0_i32 = arith.constant 0 : i32
    %c0_i32_0 = arith.constant 0 : i32
    %c0_i32_1 = arith.constant 0 : i32
    return %c0_i32, %c0_i32_0 : i32, i32
  }
  func.func @transform_9(%arg0: i32) -> (i32, i32) {
    %c0_i32 = arith.constant 0 : i32
    %c0_i32_0 = arith.constant 0 : i32
    %c0_i32_1 = arith.constant 0 : i32
    return %c0_i32, %c0_i32_0 : i32, i32
  }
}

</mosaic_0001>

<llo_original>
// kernel: tpu_custom_call.1
$region0: #{tpu_custom_call.1}
  #allocation0 [shape = 'u32[]', space=smem, size = 0x4, offset = 0x4, fixed_abs, tag = 'smem constant byte address 0x4 - core index']
  #allocation1 [shape = 'u32[144,128]{1,0:T(1,128)}', space=vmem, size = 0x12000, scoped, tag = 'internal scratch']
  %s0 = inlined_call_operand.hbm [shape: bf16[16,16], index: 0, kind: input, shape index: {}]
  %s1 = inlined_call_operand.hbm [shape: bf16[7,16,128], index: 1, kind: input, shape index: {}]
  %s2 = inlined_call_operand.vmem [shape: f32[7,1,128], index: 2, kind: input, shape index: {}]
  %s3 = inlined_call_operand.hbm [shape: bf16[7,128,128], index: 3, kind: input, shape index: {}]
  %s4 = inlined_call_operand.vmem [shape: f32[7,1,128], index: 4, kind: input, shape index: {}]
  %s5 = inlined_call_operand.hbm [shape: bf16[7,128,128], index: 5, kind: input, shape index: {}]
  %s6 = inlined_call_operand.vmem [shape: f32[7,1,128], index: 6, kind: input, shape index: {}]
  %s7 = inlined_call_operand.hbm [shape: f32[16,384], index: 7, kind: output, shape index: {0}]
  %s8 = inlined_call_operand.hbm [shape: f32[16,384], index: 8, kind: output, shape index: {1}]
  %s9 = inlined_call_operand.hbm [shape: f32[16,128], index: 9, kind: output, shape index: {2}]
  %10 = xla_tuple %s7, %s8, %s9
  %s11 = sld [smem:[#allocation0]]
  $region70: #{tpu_custom_call.1} parent=0
    _
  %s13 = ssub.s32 1, %s11
  %s14 = scalar_select 0, %s13, %s11
  $region1: #{tpu_custom_call.1} parent=0
    #allocation2 [shape = 'u8[4096]{0}', space=vmem, size = 0x1000, scoped, tag = 'input window, operand 0, single buffered']
    #allocation3 [shape = 's32[1]{0}', space=sflag, size = 0x4, scoped, tag = 'scoped memory for tpu_custom_call.1']
    #allocation4 [shape = 's32[1]{0}', space=sflag, size = 0x4, scoped, tag = 'scoped memory for tpu_custom_call.1']
    #allocation5 [shape = 'u8[28672]{0}', space=vmem, size = 0x7000, scoped, tag = 'input window, operand 1, single buffered']
    #allocation6 [shape = 's32[1]{0}', space=sflag, size = 0x4, scoped, tag = 'scoped memory for tpu_custom_call.1']
    #allocation7 [shape = 'u8[229376]{0}', space=vmem, size = 0x38000, scoped, tag = 'input window, operand 3, single buffered']
    #allocation8 [shape = 'u8[229376]{0}', space=vmem, size = 0x38000, scoped, tag = 'input window, operand 5, single buffered']
    #allocation9 [shape = 's32[1]{0}', space=sflag, size = 0x4, scoped, tag = 'scoped memory for tpu_custom_call.1']
    #allocation10 [shape = 'u8[24576]{0}', space=vmem, size = 0x6000, scoped, tag = 'output window, operand 0, single buffered']
    #allocation11 [shape = 'u8[24576]{0}', space=vmem, size = 0x6000, scoped, tag = 'output window, operand 1, single buffered']
    #allocation12 [shape = 's32[1]{0}', space=sflag, size = 0x4, scoped, tag = 'scoped memory for tpu_custom_call.1']
    #allocation13 [shape = 'u8[8192]{0}', space=vmem, size = 0x2000, scoped, tag = 'output window, operand 2, single buffered']
    %15 = vsyncpa [#allocation3], 0
    %16 = vsyncpa [#allocation6], 0
    %17 = vsyncpa [#allocation9], 0
    %18 = vsyncpa [#allocation4], 0
    %19 = vsyncpa [#allocation12], 0
    // Predicated region
    $region2: #{tpu_custom_call.1} parent=1 // pred_check
      _
    $region3: #{tpu_custom_call.1} parent=1 // pred_check_branch
      %21 = sbr.rel (0) target = $region5
    $region4: #{tpu_custom_call.1} parent=1 // pred_region
      %s23 = ssub.s32 128, 128
      %24 = vsyncadd [#allocation3], %s23
      %s25 = sshll.u32 [#allocation2], 4
      %s26 = int_to_ptr.vmem [resolvable:$true] %s25
      %31 = dma.hbm_to_vmem [thread:$0]  %s0, 128, %s26, [#allocation3], 64, 64, 4
    $region5: #{tpu_custom_call.1} parent=1 // pred_fallthru
      _
    // Predicated region
    $region6: #{tpu_custom_call.1} parent=1 // pred_check
      _
    $region7: #{tpu_custom_call.1} parent=1 // pred_check_branch
      %33 = sbr.rel (0) target = $region9
    $region8: #{tpu_custom_call.1} parent=1 // pred_region
      %s35 = ssub.s32 896, 896
      %36 = vsyncadd [#allocation6], %s35
      %s37 = sshll.u32 [#allocation5], 4
      %s38 = int_to_ptr.vmem [resolvable:$true] %s37
      %43 = dma.hbm_to_vmem [thread:$0]  %s1, 896, %s38, [#allocation6], 64, 64, 4
    $region9: #{tpu_custom_call.1} parent=1 // pred_fallthru
      _
    // Predicated region
    $region10: #{tpu_custom_call.1} parent=1 // pred_check
      _
    $region11: #{tpu_custom_call.1} parent=1 // pred_check_branch
      %45 = sbr.rel (0) target = $region13
    $region12: #{tpu_custom_call.1} parent=1 // pred_region
      _
    $region13: #{tpu_custom_call.1} parent=1 // pred_fallthru
      _
    // Predicated region
    $region14: #{tpu_custom_call.1} parent=1 // pred_check
      _
    $region15: #{tpu_custom_call.1} parent=1 // pred_check_branch
      %47 = sbr.rel (0) target = $region17
    $region16: #{tpu_custom_call.1} parent=1 // pred_region
      %s49 = ssub.s32 7168, 7168
      %50 = vsyncadd [#allocation6], %s49
      %s51 = sshll.u32 [#allocation7], 4
      %s52 = int_to_ptr.vmem [resolvable:$true] %s51
      %57 = dma.hbm_to_vmem [thread:$0]  %s3, 7168, %s52, [#allocation6], 64, 64, 4
    $region17: #{tpu_custom_call.1} parent=1 // pred_fallthru
      _
    // Predicated region
    $region18: #{tpu_custom_call.1} parent=1 // pred_check
      _
    $region19: #{tpu_custom_call.1} parent=1 // pred_check_branch
      %59 = sbr.rel (0) target = $region21
    $region20: #{tpu_custom_call.1} parent=1 // pred_region
      _
    $region21: #{tpu_custom_call.1} parent=1 // pred_fallthru
      _
    // Predicated region
    $region22: #{tpu_custom_call.1} parent=1 // pred_check
      _
    $region23: #{tpu_custom_call.1} parent=1 // pred_check_branch
      %61 = sbr.rel (0) target = $region25
    $region24: #{tpu_custom_call.1} parent=1 // pred_region
      %s63 = ssub.s32 7168, 7168
      %64 = vsyncadd [#allocation9], %s63
      %s65 = sshll.u32 [#allocation8], 4
      %s66 = int_to_ptr.vmem [resolvable:$true] %s65
      %71 = dma.hbm_to_vmem [thread:$0]  %s5, 7168, %s66, [#allocation9], 64, 64, 4
    $region25: #{tpu_custom_call.1} parent=1 // pred_fallthru
      _
    // Predicated region
    $region26: #{tpu_custom_call.1} parent=1 // pred_check
      _
    $region27: #{tpu_custom_call.1} parent=1 // pred_check_branch
      %73 = sbr.rel (0) target = $region29
    $region28: #{tpu_custom_call.1} parent=1 // pred_region
      _
    $region29: #{tpu_custom_call.1} parent=1 // pred_fallthru
      _
    // Predicated region
    $region30: #{tpu_custom_call.1} parent=1 // pred_check
      _
    $region31: #{tpu_custom_call.1} parent=1 // pred_check_branch
      %75 = sbr.rel (0) target = $region33
    $region32: #{tpu_custom_call.1} parent=1 // pred_region
      %76 = dma.done [#allocation3], 128
    $region33: #{tpu_custom_call.1} parent=1 // pred_fallthru
      _
    // Predicated region
    $region34: #{tpu_custom_call.1} parent=1 // pred_check
      _
    $region35: #{tpu_custom_call.1} parent=1 // pred_check_branch
      %78 = sbr.rel (0) target = $region37
    $region36: #{tpu_custom_call.1} parent=1 // pred_region
      %79 = dma.done [#allocation6], 896
    $region37: #{tpu_custom_call.1} parent=1 // pred_fallthru
      _
    // Predicated region
    $region38: #{tpu_custom_call.1} parent=1 // pred_check
      _
    $region39: #{tpu_custom_call.1} parent=1 // pred_check_branch
      %81 = sbr.rel (0) target = $region41
    $region40: #{tpu_custom_call.1} parent=1 // pred_region
      %82 = dma.done [#allocation6], 7168
    $region41: #{tpu_custom_call.1} parent=1 // pred_fallthru
      _
    // Predicated region
    $region42: #{tpu_custom_call.1} parent=1 // pred_check
      _
    $region43: #{tpu_custom_call.1} parent=1 // pred_check_branch
      %84 = sbr.rel (0) target = $region45
    $region44: #{tpu_custom_call.1} parent=1 // pred_region
      %85 = dma.done [#allocation9], 7168
    $region45: #{tpu_custom_call.1} parent=1 // pred_fallthru
      _
    %v87 = vld [vmem:[#allocation2] sm:$0xf]
    %v88 = vld [vmem:[#allocation2 + $0x4] sm:$0xf]
    %v89 = vld [vmem:[#allocation5] sm:$0xf]
    %v90 = vld [vmem:[#allocation5 + $0x4] sm:$0xf]
    %v91 = vld [vmem:[%s2] sm:$0x1]
    %v93 = vlaneseq
    %v94 = vshrl.u32 %v93, 7
    %v95 = vsub.s32 0, %v94
    %v96 = vrot.slane %v91, %v95
    %v100 = vunpack.c.l.b16 %v87
    %v101 = vunpack.c.l.b16 %v88
    %v102 = vpack.c.b16 %v101, %v100
    %v105 = vunpack.c.l.b16 %v89
    %v106 = vunpack.c.l.b16 %v90
    %v107 = vpack.c.b16 %v106, %v105
    %vm109 = vcmask 130048
    %v111 = vsel %vm109, %v102, 0
    %113 = vmatprep.subr.bf16.mxu0 0
    %114 = vmatpush1.bf16.msra.mxu0 %v107
    %115 = vmatprep.subr.bf16.mxu0 0
    %116 = vmatpush1.bf16.msra.mxu0 0
    %117 = vmatprep.subr.bf16.mxu0 0
    %118 = vmatpush1.bf16.msra.mxu0 0
    %119 = vmatprep.subr.bf16.mxu0 0
    %120 = vmatpush1.bf16.msra.mxu0 0
    %121 = vmatprep.subr.bf16.mxu0 0
    %122 = vmatpush1.bf16.msra.mxu0 0
    %123 = vmatprep.subr.bf16.mxu0 0
    %124 = vmatpush1.bf16.msra.mxu0 0
    %125 = vmatprep.subr.bf16.mxu0 0
    %126 = vmatpush1.bf16.msra.mxu0 0
    %127 = vmatprep.subr.bf16.mxu0 0
    %128 = vmatpush1.bf16.msra.mxu0 0
    %129 = vmatprep.subr.bf16.mxu0 0
    %130 = vmatpush1.bf16.msra.mxu0 0
    %131 = vmatprep.subr.bf16.mxu0 0
    %132 = vmatpush1.bf16.msra.mxu0 0
    %133 = vmatprep.subr.bf16.mxu0 0
    %134 = vmatpush1.bf16.msra.mxu0 0
    %135 = vmatprep.subr.bf16.mxu0 0
    %136 = vmatpush1.bf16.msra.mxu0 0
    %137 = vmatprep.subr.bf16.mxu0 0
    %138 = vmatpush1.bf16.msra.mxu0 0
    %139 = vmatprep.subr.bf16.mxu0 0
    %140 = vmatpush1.bf16.msra.mxu0 0
    %141 = vmatprep.subr.bf16.mxu0 0
    %142 = vmatpush1.bf16.msra.mxu0 0
    %143 = vmatprep.subr.bf16.mxu0 0
    %144 = vmatpush1.bf16.msra.mxu0 0
    %145 = vmatprep.mubr.bf16.mxu0 0
    %146 = vmatmul.mubr.bf16.gmra.mrb[0].mxu0 %v111
    %v147 = vpop.f32.mrb[0].mxu0
    %v148 = vadd.f32 %v96, %v147
    %v149 = vpop.f32.mrb[0].mxu0
    %v150 = vpop.f32.mrb[0].mxu0
    %v151 = vadd.f32 %v96, %v150
    %v152 = vpop.f32.mrb[0].mxu0
    %153 = vdwg.mxu0
    %v154 = vtanh.pop %v148
    %v155 = vtanh.pop %v151
    %v156 = vpack.c.bf16 %v155, %v154
    %v157 = vld [vmem:[#allocation7] sm:$0xf]
    %v158 = vld [vmem:[#allocation7 + $0x4] sm:$0xf]
    %v159 = vld [vmem:[#allocation7 + $0x8] sm:$0xf]
    %v160 = vld [vmem:[#allocation7 + $0xc] sm:$0xf]
    %v161 = vld [vmem:[#allocation7 + $0x10] sm:$0xf]
    %v162 = vld [vmem:[#allocation7 + $0x14] sm:$0xf]
    %v163 = vld [vmem:[#allocation7 + $0x18] sm:$0xf]
    %v164 = vld [vmem:[#allocation7 + $0x1c] sm:$0xf]
    %v165 = vld [vmem:[#allocation7 + $0x20] sm:$0xf]
    %v166 = vld [vmem:[#allocation7 + $0x24] sm:$0xf]
    %v167 = vld [vmem:[#allocation7 + $0x28] sm:$0xf]
    %v168 = vld [vmem:[#allocation7 + $0x2c] sm:$0xf]
    %v169 = vld [vmem:[#allocation7 + $0x30] sm:$0xf]
    %v170 = vld [vmem:[#allocation7 + $0x34] sm:$0xf]
    %v171 = vld [vmem:[#allocation7 + $0x38] sm:$0xf]
    %v172 = vld [vmem:[#allocation7 + $0x3c] sm:$0xf]
    %v173 = vld [vmem:[%s4] sm:$0x1]
    %v175 = vlaneseq
    %v176 = vshrl.u32 %v175, 7
    %v177 = vsub.s32 0, %v176
    %v178 = vrot.slane %v173, %v177
    %v196 = vunpack.c.l.b16 %v157
    %v197 = vunpack.c.l.b16 %v158
    %v198 = vunpack.c.l.b16 %v159
    %v199 = vunpack.c.l.b16 %v160
    %v200 = vunpack.c.l.b16 %v161
    %v201 = vunpack.c.l.b16 %v162
    %v202 = vunpack.c.l.b16 %v163
    %v203 = vunpack.c.l.b16 %v164
    %v204 = vunpack.c.l.b16 %v165
    %v205 = vunpack.c.l.b16 %v166
    %v206 = vunpack.c.l.b16 %v167
    %v207 = vunpack.c.l.b16 %v168
    %v208 = vunpack.c.l.b16 %v169
    %v209 = vunpack.c.l.b16 %v170
    %v210 = vunpack.c.l.b16 %v171
    %v211 = vunpack.c.l.b16 %v172
    %v212 = vpack.c.b16 %v197, %v196
    %v213 = vpack.c.b16 %v199, %v198
    %v214 = vpack.c.b16 %v201, %v200
    %v215 = vpack.c.b16 %v203, %v202
    %v216 = vpack.c.b16 %v205, %v204
    %v217 = vpack.c.b16 %v207, %v206
    %v218 = vpack.c.b16 %v209, %v208
    %v219 = vpack.c.b16 %v211, %v210
    %228 = vmatprep.subr.bf16.mxu0 0
    %229 = vmatpush1.bf16.msra.mxu0 %v212
    %230 = vmatprep.subr.bf16.mxu0 0
    %231 = vmatpush1.bf16.msra.mxu0 %v213
    %232 = vmatprep.subr.bf16.mxu0 0
    %233 = vmatpush1.bf16.msra.mxu0 %v214
    %234 = vmatprep.subr.bf16.mxu0 0
    %235 = vmatpush1.bf16.msra.mxu0 %v215
    %236 = vmatprep.subr.bf16.mxu0 0
    %237 = vmatpush1.bf16.msra.mxu0 %v216
    %238 = vmatprep.subr.bf16.mxu0 0
    %239 = vmatpush1.bf16.msra.mxu0 %v217
    %240 = vmatprep.subr.bf16.mxu0 0
    %241 = vmatpush1.bf16.msra.mxu0 %v218
    %242 = vmatprep.subr.bf16.mxu0 0
    %243 = vmatpush1.bf16.msra.mxu0 %v219
    %244 = vmatprep.subr.bf16.mxu0 0
    %245 = vmatpush1.bf16.msra.mxu0 0
    %246 = vmatprep.subr.bf16.mxu0 0
    %247 = vmatpush1.bf16.msra.mxu0 0
    %248 = vmatprep.subr.bf16.mxu0 0
    %249 = vmatpush1.bf16.msra.mxu0 0
    %250 = vmatprep.subr.bf16.mxu0 0
    %251 = vmatpush1.bf16.msra.mxu0 0
    %252 = vmatprep.subr.bf16.mxu0 0
    %253 = vmatpush1.bf16.msra.mxu0 0
    %254 = vmatprep.subr.bf16.mxu0 0
    %255 = vmatpush1.bf16.msra.mxu0 0
    %256 = vmatprep.subr.bf16.mxu0 0
    %257 = vmatpush1.bf16.msra.mxu0 0
    %258 = vmatprep.subr.bf16.mxu0 0
    %259 = vmatpush1.bf16.msra.mxu0 0
    %260 = vmatprep.mubr.bf16.mxu0 0
    %261 = vmatmul.mubr.bf16.gmra.mrb[0].mxu0 %v156
    %v262 = vpop.f32.mrb[0].mxu0
    %v263 = vadd.f32 %v178, %v262
    %v264 = vpop.f32.mrb[0].mxu0
    %v265 = vpop.f32.mrb[0].mxu0
    %v266 = vadd.f32 %v178, %v265
    %v267 = vpop.f32.mrb[0].mxu0
    %268 = vdwg.mxu0
    %v269 = vtanh.pop %v263
    %v270 = vtanh.pop %v266
    %v271 = vpack.c.bf16 %v270, %v269
    %v272 = vld [vmem:[#allocation8] sm:$0xf]
    %v273 = vld [vmem:[#allocation8 + $0x4] sm:$0xf]
    %v274 = vld [vmem:[#allocation8 + $0x8] sm:$0xf]
    %v275 = vld [vmem:[#allocation8 + $0xc] sm:$0xf]
    %v276 = vld [vmem:[#allocation8 + $0x10] sm:$0xf]
    %v277 = vld [vmem:[#allocation8 + $0x14] sm:$0xf]
    %v278 = vld [vmem:[#allocation8 + $0x18] sm:$0xf]
    %v279 = vld [vmem:[#allocation8 + $0x1c] sm:$0xf]
    %v280 = vld [vmem:[#allocation8 + $0x20] sm:$0xf]
    %v281 = vld [vmem:[#allocation8 + $0x24] sm:$0xf]
    %v282 = vld [vmem:[#allocation8 + $0x28] sm:$0xf]
    %v283 = vld [vmem:[#allocation8 + $0x2c] sm:$0xf]
    %v284 = vld [vmem:[#allocation8 + $0x30] sm:$0xf]
    %v285 = vld [vmem:[#allocation8 + $0x34] sm:$0xf]
    %v286 = vld [vmem:[#allocation8 + $0x38] sm:$0xf]
    %v287 = vld [vmem:[#allocation8 + $0x3c] sm:$0xf]
    %v288 = vld [vmem:[%s6] sm:$0x1]
    %v290 = vlaneseq
    %v291 = vshrl.u32 %v290, 7
    %v292 = vsub.s32 0, %v291
    %v293 = vrot.slane %v288, %v292
    %v311 = vunpack.c.l.b16 %v272
    %v312 = vunpack.c.l.b16 %v273
    %v313 = vunpack.c.l.b16 %v274
    %v314 = vunpack.c.l.b16 %v275
    %v315 = vunpack.c.l.b16 %v276
    %v316 = vunpack.c.l.b16 %v277
    %v317 = vunpack.c.l.b16 %v278
    %v318 = vunpack.c.l.b16 %v279
    %v319 = vunpack.c.l.b16 %v280
    %v320 = vunpack.c.l.b16 %v281
    %v321 = vunpack.c.l.b16 %v282
    %v322 = vunpack.c.l.b16 %v283
    %v323 = vunpack.c.l.b16 %v284
    %v324 = vunpack.c.l.b16 %v285
    %v325 = vunpack.c.l.b16 %v286
    %v326 = vunpack.c.l.b16 %v287
    %v327 = vpack.c.b16 %v312, %v311
    %v328 = vpack.c.b16 %v314, %v313
    %v329 = vpack.c.b16 %v316, %v315
    %v330 = vpack.c.b16 %v318, %v317
    %v331 = vpack.c.b16 %v320, %v319
    %v332 = vpack.c.b16 %v322, %v321
    %v333 = vpack.c.b16 %v324, %v323
    %v334 = vpack.c.b16 %v326, %v325
    %343 = vmatprep.subr.bf16.mxu0 0
    %344 = vmatpush1.bf16.msra.mxu0 %v327
    %345 = vmatprep.subr.bf16.mxu0 0
    %346 = vmatpush1.bf16.msra.mxu0 %v328
    %347 = vmatprep.subr.bf16.mxu0 0
    %348 = vmatpush1.bf16.msra.mxu0 %v329
    %349 = vmatprep.subr.bf16.mxu0 0
    %350 = vmatpush1.bf16.msra.mxu0 %v330
    %351 = vmatprep.subr.bf16.mxu0 0
    %352 = vmatpush1.bf16.msra.mxu0 %v331
    %353 = vmatprep.subr.bf16.mxu0 0
    %354 = vmatpush1.bf16.msra.mxu0 %v332
    %355 = vmatprep.subr.bf16.mxu0 0
    %356 = vmatpush1.bf16.msra.mxu0 %v333
    %357 = vmatprep.subr.bf16.mxu0 0
    %358 = vmatpush1.bf16.msra.mxu0 %v334
    %359 = vmatprep.subr.bf16.mxu0 0
    %360 = vmatpush1.bf16.msra.mxu0 0
    %361 = vmatprep.subr.bf16.mxu0 0
    %362 = vmatpush1.bf16.msra.mxu0 0
    %363 = vmatprep.subr.bf16.mxu0 0
    %364 = vmatpush1.bf16.msra.mxu0 0
    %365 = vmatprep.subr.bf16.mxu0 0
    %366 = vmatpush1.bf16.msra.mxu0 0
    %367 = vmatprep.subr.bf16.mxu0 0
    %368 = vmatpush1.bf16.msra.mxu0 0
    %369 = vmatprep.subr.bf16.mxu0 0
    %370 = vmatpush1.bf16.msra.mxu0 0
    %371 = vmatprep.subr.bf16.mxu0 0
    %372 = vmatpush1.bf16.msra.mxu0 0
    %373 = vmatprep.subr.bf16.mxu0 0
    %374 = vmatpush1.bf16.msra.mxu0 0
    %375 = vmatprep.mubr.bf16.mxu0 0
    %376 = vmatmul.mubr.bf16.gmra.mrb[0].mxu0 %v271
    %v377 = vpop.f32.mrb[0].mxu0
    %v378 = vadd.f32 %v293, %v377
    %v379 = vpop.f32.mrb[0].mxu0
    %v380 = vpop.f32.mrb[0].mxu0
    %v381 = vadd.f32 %v293, %v380
    %v382 = vpop.f32.mrb[0].mxu0
    %383 = vdwg.mxu0
    %v384 = vtanh.pop %v378
    %v385 = vtanh.pop %v381
    %386 = vst [vmem:[#allocation10] sm:$0xff] %v384
    %387 = vst [vmem:[#allocation10 + $0x18] sm:$0xff] %v385
    %s388 = scalar_lea.vmem [#allocation5], 8
    %v389 = vld [vmem:[%s388] sm:$0xf]
    %v390 = vld [vmem:[%s388 + $0x4] sm:$0xf]
    %s391 = scalar_lea.vmem %s2, 1
    %v392 = vld [vmem:[%s391] sm:$0x1]
    %v394 = vlaneseq
    %v395 = vshrl.u32 %v394, 7
    %v396 = vsub.s32 0, %v395
    %v397 = vrot.slane %v392, %v396
    %v401 = vunpack.c.l.b16 %v389
    %v402 = vunpack.c.l.b16 %v390
    %v403 = vpack.c.b16 %v402, %v401
    %405 = vmatprep.subr.bf16.mxu0 0
    %406 = vmatpush1.bf16.msra.mxu0 %v403
    %407 = vmatprep.subr.bf16.mxu0 0
    %408 = vmatpush1.bf16.msra.mxu0 0
    %409 = vmatprep.subr.bf16.mxu0 0
    %410 = vmatpush1.bf16.msra.mxu0 0
    %411 = vmatprep.subr.bf16.mxu0 0
    %412 = vmatpush1.bf16.msra.mxu0 0
    %413 = vmatprep.subr.bf16.mxu0 0
    %414 = vmatpush1.bf16.msra.mxu0 0
    %415 = vmatprep.subr.bf16.mxu0 0
    %416 = vmatpush1.bf16.msra.mxu0 0
    %417 = vmatprep.subr.bf16.mxu0 0
    %418 = vmatpush1.bf16.msra.mxu0 0
    %419 = vmatprep.subr.bf16.mxu0 0
    %420 = vmatpush1.bf16.msra.mxu0 0
    %421 = vmatprep.subr.bf16.mxu0 0
    %422 = vmatpush1.bf16.msra.mxu0 0
    %423 = vmatprep.subr.bf16.mxu0 0
    %424 = vmatpush1.bf16.msra.mxu0 0
    %425 = vmatprep.subr.bf16.mxu0 0
    %426 = vmatpush1.bf16.msra.mxu0 0
    %427 = vmatprep.subr.bf16.mxu0 0
    %428 = vmatpush1.bf16.msra.mxu0 0
    %429 = vmatprep.subr.bf16.mxu0 0
    %430 = vmatpush1.bf16.msra.mxu0 0
    %431 = vmatprep.subr.bf16.mxu0 0
    %432 = vmatpush1.bf16.msra.mxu0 0
    %433 = vmatprep.subr.bf16.mxu0 0
    %434 = vmatpush1.bf16.msra.mxu0 0
    %435 = vmatprep.subr.bf16.mxu0 0
    %436 = vmatpush1.bf16.msra.mxu0 0
    %437 = vmatprep.mubr.bf16.mxu0 0
    %438 = vmatmul.mubr.bf16.gmra.mrb[0].mxu0 %v111
    %v439 = vpop.f32.mrb[0].mxu0
    %v440 = vadd.f32 %v397, %v439
    %v441 = vpop.f32.mrb[0].mxu0
    %v442 = vpop.f32.mrb[0].mxu0
    %v443 = vadd.f32 %v397, %v442
    %v444 = vpop.f32.mrb[0].mxu0
    %445 = vdwg.mxu0
    %v446 = vtanh.pop %v440
    %v447 = vtanh.pop %v443
    %v448 = vpack.c.bf16 %v447, %v446
    %s449 = scalar_lea.vmem [#allocation7], 64
    %v450 = vld [vmem:[%s449] sm:$0xf]
    %v451 = vld [vmem:[%s449 + $0x4] sm:$0xf]
    %v452 = vld [vmem:[%s449 + $0x8] sm:$0xf]
    %v453 = vld [vmem:[%s449 + $0xc] sm:$0xf]
    %v454 = vld [vmem:[%s449 + $0x10] sm:$0xf]
    %v455 = vld [vmem:[%s449 + $0x14] sm:$0xf]
    %v456 = vld [vmem:[%s449 + $0x18] sm:$0xf]
    %v457 = vld [vmem:[%s449 + $0x1c] sm:$0xf]
    %v458 = vld [vmem:[%s449 + $0x20] sm:$0xf]
    %v459 = vld [vmem:[%s449 + $0x24] sm:$0xf]
    %v460 = vld [vmem:[%s449 + $0x28] sm:$0xf]
    %v461 = vld [vmem:[%s449 + $0x2c] sm:$0xf]
    %v462 = vld [vmem:[%s449 + $0x30] sm:$0xf]
    %v463 = vld [vmem:[%s449 + $0x34] sm:$0xf]
    %v464 = vld [vmem:[%s449 + $0x38] sm:$0xf]
    %v465 = vld [vmem:[%s449 + $0x3c] sm:$0xf]
    %s466 = scalar_lea.vmem %s4, 1
    %v467 = vld [vmem:[%s466] sm:$0x1]
    %v469 = vlaneseq
    %v470 = vshrl.u32 %v469, 7
    %v471 = vsub.s32 0, %v470
    %v472 = vrot.slane %v467, %v471
    %v490 = vunpack.c.l.b16 %v450
    %v491 = vunpack.c.l.b16 %v451
    %v492 = vunpack.c.l.b16 %v452
    %v493 = vunpack.c.l.b16 %v453
    %v494 = vunpack.c.l.b16 %v454
    %v495 = vunpack.c.l.b16 %v455
    %v496 = vunpack.c.l.b16 %v456
    %v497 = vunpack.c.l.b16 %v457
    %v498 = vunpack.c.l.b16 %v458
    %v499 = vunpack.c.l.b16 %v459
    %v500 = vunpack.c.l.b16 %v460
    %v501 = vunpack.c.l.b16 %v461
    %v502 = vunpack.c.l.b16 %v462
    %v503 = vunpack.c.l.b16 %v463
    %v504 = vunpack.c.l.b16 %v464
    %v505 = vunpack.c.l.b16 %v465
    %v506 = vpack.c.b16 %v491, %v490
    %v507 = vpack.c.b16 %v493, %v492
    %v508 = vpack.c.b16 %v495, %v494
    %v509 = vpack.c.b16 %v497, %v496
    %v510 = vpack.c.b16 %v499, %v498
    %v511 = vpack.c.b16 %v501, %v500
    %v512 = vpack.c.b16 %v503, %v502
    %v513 = vpack.c.b16 %v505, %v504
    %522 = vmatprep.subr.bf16.mxu0 0
    %523 = vmatpush1.bf16.msra.mxu0 %v506
    %524 = vmatprep.subr.bf16.mxu0 0
    %525 = vmatpush1.bf16.msra.mxu0 %v507
    %526 = vmatprep.subr.bf16.mxu0 0
    %527 = vmatpush1.bf16.msra.mxu0 %v508
    %528 = vmatprep.subr.bf16.mxu0 0
    %529 = vmatpush1.bf16.msra.mxu0 %v509
    %530 = vmatprep.subr.bf16.mxu0 0
    %531 = vmatpush1.bf16.msra.mxu0 %v510
    %532 = vmatprep.subr.bf16.mxu0 0
    %533 = vmatpush1.bf16.msra.mxu0 %v511
    %534 = vmatprep.subr.bf16.mxu0 0
    %535 = vmatpush1.bf16.msra.mxu0 %v512
    %536 = vmatprep.subr.bf16.mxu0 0
    %537 = vmatpush1.bf16.msra.mxu0 %v513
    %538 = vmatprep.subr.bf16.mxu0 0
    %539 = vmatpush1.bf16.msra.mxu0 0
    %540 = vmatprep.subr.bf16.mxu0 0
    %541 = vmatpush1.bf16.msra.mxu0 0
    %542 = vmatprep.subr.bf16.mxu0 0
    %543 = vmatpush1.bf16.msra.mxu0 0
    %544 = vmatprep.subr.bf16.mxu0 0
    %545 = vmatpush1.bf16.msra.mxu0 0
    %546 = vmatprep.subr.bf16.mxu0 0
    %547 = vmatpush1.bf16.msra.mxu0 0
    %548 = vmatprep.subr.bf16.mxu0 0
    %549 = vmatpush1.bf16.msra.mxu0 0
    %550 = vmatprep.subr.bf16.mxu0 0
    %551 = vmatpush1.bf16.msra.mxu0 0
    %552 = vmatprep.subr.bf16.mxu0 0
    %553 = vmatpush1.bf16.msra.mxu0 0
    %554 = vmatprep.mubr.bf16.mxu0 0
    %555 = vmatmul.mubr.bf16.gmra.mrb[0].mxu0 %v448
    %v556 = vpop.f32.mrb[0].mxu0
    %v557 = vadd.f32 %v472, %v556
    %v558 = vpop.f32.mrb[0].mxu0
    %v559 = vpop.f32.mrb[0].mxu0
    %v560 = vadd.f32 %v472, %v559
    %v561 = vpop.f32.mrb[0].mxu0
    %562 = vdwg.mxu0
    %v563 = vtanh.pop %v557
    %v564 = vtanh.pop %v560
    %v565 = vpack.c.bf16 %v564, %v563
    %s566 = scalar_lea.vmem [#allocation8], 64
    %v567 = vld [vmem:[%s566] sm:$0xf]
    %v568 = vld [vmem:[%s566 + $0x4] sm:$0xf]
    %v569 = vld [vmem:[%s566 + $0x8] sm:$0xf]
    %v570 = vld [vmem:[%s566 + $0xc] sm:$0xf]
    %v571 = vld [vmem:[%s566 + $0x10] sm:$0xf]
    %v572 = vld [vmem:[%s566 + $0x14] sm:$0xf]
    %v573 = vld [vmem:[%s566 + $0x18] sm:$0xf]
    %v574 = vld [vmem:[%s566 + $0x1c] sm:$0xf]
    %v575 = vld [vmem:[%s566 + $0x20] sm:$0xf]
    %v576 = vld [vmem:[%s566 + $0x24] sm:$0xf]
    %v577 = vld [vmem:[%s566 + $0x28] sm:$0xf]
    %v578 = vld [vmem:[%s566 + $0x2c] sm:$0xf]
    %v579 = vld [vmem:[%s566 + $0x30] sm:$0xf]
    %v580 = vld [vmem:[%s566 + $0x34] sm:$0xf]
    %v581 = vld [vmem:[%s566 + $0x38] sm:$0xf]
    %v582 = vld [vmem:[%s566 + $0x3c] sm:$0xf]
    %s583 = scalar_lea.vmem %s6, 1
    %v584 = vld [vmem:[%s583] sm:$0x1]
    %v586 = vlaneseq
    %v587 = vshrl.u32 %v586, 7
    %v588 = vsub.s32 0, %v587
    %v589 = vrot.slane %v584, %v588
    %v607 = vunpack.c.l.b16 %v567
    %v608 = vunpack.c.l.b16 %v568
    %v609 = vunpack.c.l.b16 %v569
    %v610 = vunpack.c.l.b16 %v570
    %v611 = vunpack.c.l.b16 %v571
    %v612 = vunpack.c.l.b16 %v572
    %v613 = vunpack.c.l.b16 %v573
    %v614 = vunpack.c.l.b16 %v574
    %v615 = vunpack.c.l.b16 %v575
    %v616 = vunpack.c.l.b16 %v576
    %v617 = vunpack.c.l.b16 %v577
    %v618 = vunpack.c.l.b16 %v578
    %v619 = vunpack.c.l.b16 %v579
    %v620 = vunpack.c.l.b16 %v580
    %v621 = vunpack.c.l.b16 %v581
    %v622 = vunpack.c.l.b16 %v582
    %v623 = vpack.c.b16 %v608, %v607
    %v624 = vpack.c.b16 %v610, %v609
    %v625 = vpack.c.b16 %v612, %v611
    %v626 = vpack.c.b16 %v614, %v613
    %v627 = vpack.c.b16 %v616, %v615
    %v628 = vpack.c.b16 %v618, %v617
    %v629 = vpack.c.b16 %v620, %v619
    %v630 = vpack.c.b16 %v622, %v621
    %639 = vmatprep.subr.bf16.mxu0 0
    %640 = vmatpush1.bf16.msra.mxu0 %v623
    %641 = vmatprep.subr.bf16.mxu0 0
    %642 = vmatpush1.bf16.msra.mxu0 %v624
    %643 = vmatprep.subr.bf16.mxu0 0
    %644 = vmatpush1.bf16.msra.mxu0 %v625
    %645 = vmatprep.subr.bf16.mxu0 0
    %646 = vmatpush1.bf16.msra.mxu0 %v626
    %647 = vmatprep.subr.bf16.mxu0 0
    %648 = vmatpush1.bf16.msra.mxu0 %v627
    %649 = vmatprep.subr.bf16.mxu0 0
    %650 = vmatpush1.bf16.msra.mxu0 %v628
    %651 = vmatprep.subr.bf16.mxu0 0
    %652 = vmatpush1.bf16.msra.mxu0 %v629
    %653 = vmatprep.subr.bf16.mxu0 0
    %654 = vmatpush1.bf16.msra.mxu0 %v630
    %655 = vmatprep.subr.bf16.mxu0 0
    %656 = vmatpush1.bf16.msra.mxu0 0
    %657 = vmatprep.subr.bf16.mxu0 0
    %658 = vmatpush1.bf16.msra.mxu0 0
    %659 = vmatprep.subr.bf16.mxu0 0
    %660 = vmatpush1.bf16.msra.mxu0 0
    %661 = vmatprep.subr.bf16.mxu0 0
    %662 = vmatpush1.bf16.msra.mxu0 0
    %663 = vmatprep.subr.bf16.mxu0 0
    %664 = vmatpush1.bf16.msra.mxu0 0
    %665 = vmatprep.subr.bf16.mxu0 0
    %666 = vmatpush1.bf16.msra.mxu0 0
    %667 = vmatprep.subr.bf16.mxu0 0
    %668 = vmatpush1.bf16.msra.mxu0 0
    %669 = vmatprep.subr.bf16.mxu0 0
    %670 = vmatpush1.bf16.msra.mxu0 0
    %671 = vmatprep.mubr.bf16.mxu0 0
    %672 = vmatmul.mubr.bf16.gmra.mrb[0].mxu0 %v565
    %v673 = vpop.f32.mrb[0].mxu0
    %v674 = vadd.f32 %v589, %v673
    %v675 = vpop.f32.mrb[0].mxu0
    %v676 = vpop.f32.mrb[0].mxu0
    %v677 = vadd.f32 %v589, %v676
    %v678 = vpop.f32.mrb[0].mxu0
    %679 = vdwg.mxu0
    %v680 = vtanh.pop %v674
    %v681 = vtanh.pop %v677
    %682 = vst [vmem:[#allocation10 + $0x8] sm:$0xff] %v680
    %683 = vst [vmem:[#allocation10 + $0x20] sm:$0xff] %v681
    %s684 = scalar_lea.vmem [#allocation5], 16
    %v685 = vld [vmem:[%s684] sm:$0xf]
    %v686 = vld [vmem:[%s684 + $0x4] sm:$0xf]
    %s687 = scalar_lea.vmem %s2, 2
    %v688 = vld [vmem:[%s687] sm:$0x1]
    %v690 = vlaneseq
    %v691 = vshrl.u32 %v690, 7
    %v692 = vsub.s32 0, %v691
    %v693 = vrot.slane %v688, %v692
    %v697 = vunpack.c.l.b16 %v685
    %v698 = vunpack.c.l.b16 %v686
    %v699 = vpack.c.b16 %v698, %v697
    %701 = vmatprep.subr.bf16.mxu0 0
    %702 = vmatpush1.bf16.msra.mxu0 %v699
    %703 = vmatprep.subr.bf16.mxu0 0
    %704 = vmatpush1.bf16.msra.mxu0 0
    %705 = vmatprep.subr.bf16.mxu0 0
    %706 = vmatpush1.bf16.msra.mxu0 0
    %707 = vmatprep.subr.bf16.mxu0 0
    %708 = vmatpush1.bf16.msra.mxu0 0
    %709 = vmatprep.subr.bf16.mxu0 0
    %710 = vmatpush1.bf16.msra.mxu0 0
    %711 = vmatprep.subr.bf16.mxu0 0
    %712 = vmatpush1.bf16.msra.mxu0 0
    %713 = vmatprep.subr.bf16.mxu0 0
    %714 = vmatpush1.bf16.msra.mxu0 0
    %715 = vmatprep.subr.bf16.mxu0 0
    %716 = vmatpush1.bf16.msra.mxu0 0
    %717 = vmatprep.subr.bf16.mxu0 0
    %718 = vmatpush1.bf16.msra.mxu0 0
    %719 = vmatprep.subr.bf16.mxu0 0
    %720 = vmatpush1.bf16.msra.mxu0 0
    %721 = vmatprep.subr.bf16.mxu0 0
    %722 = vmatpush1.bf16.msra.mxu0 0
    %723 = vmatprep.subr.bf16.mxu0 0
    %724 = vmatpush1.bf16.msra.mxu0 0
    %725 = vmatprep.subr.bf16.mxu0 0
    %726 = vmatpush1.bf16.msra.mxu0 0
    %727 = vmatprep.subr.bf16.mxu0 0
    %728 = vmatpush1.bf16.msra.mxu0 0
    %729 = vmatprep.subr.bf16.mxu0 0
    %730 = vmatpush1.bf16.msra.mxu0 0
    %731 = vmatprep.subr.bf16.mxu0 0
    %732 = vmatpush1.bf16.msra.mxu0 0
    %733 = vmatprep.mubr.bf16.mxu0 0
    %734 = vmatmul.mubr.bf16.gmra.mrb[0].mxu0 %v111
    %v735 = vpop.f32.mrb[0].mxu0
    %v736 = vadd.f32 %v693, %v735
    %v737 = vpop.f32.mrb[0].mxu0
    %v738 = vpop.f32.mrb[0].mxu0
    %v739 = vadd.f32 %v693, %v738
    %v740 = vpop.f32.mrb[0].mxu0
    %741 = vdwg.mxu0
    %v742 = vtanh.pop %v736
    %v743 = vtanh.pop %v739
    %v744 = vpack.c.bf16 %v743, %v742
    %s745 = scalar_lea.vmem [#allocation7], 128
    %v746 = vld [vmem:[%s745] sm:$0xf]
    %v747 = vld [vmem:[%s745 + $0x4] sm:$0xf]
    %v748 = vld [vmem:[%s745 + $0x8] sm:$0xf]
    %v749 = vld [vmem:[%s745 + $0xc] sm:$0xf]
    %v750 = vld [vmem:[%s745 + $0x10] sm:$0xf]
    %v751 = vld [vmem:[%s745 + $0x14] sm:$0xf]
    %v752 = vld [vmem:[%s745 + $0x18] sm:$0xf]
    %v753 = vld [vmem:[%s745 + $0x1c] sm:$0xf]
    %v754 = vld [vmem:[%s745 + $0x20] sm:$0xf]
    %v755 = vld [vmem:[%s745 + $0x24] sm:$0xf]
    %v756 = vld [vmem:[%s745 + $0x28] sm:$0xf]
    %v757 = vld [vmem:[%s745 + $0x2c] sm:$0xf]
    %v758 = vld [vmem:[%s745 + $0x30] sm:$0xf]
    %v759 = vld [vmem:[%s745 + $0x34] sm:$0xf]
    %v760 = vld [vmem:[%s745 + $0x38] sm:$0xf]
    %v761 = vld [vmem:[%s745 + $0x3c] sm:$0xf]
    %s762 = scalar_lea.vmem %s4, 2
    %v763 = vld [vmem:[%s762] sm:$0x1]
    %v765 = vlaneseq
    %v766 = vshrl.u32 %v765, 7
    %v767 = vsub.s32 0, %v766
    %v768 = vrot.slane %v763, %v767
    %v786 = vunpack.c.l.b16 %v746
    %v787 = vunpack.c.l.b16 %v747
    %v788 = vunpack.c.l.b16 %v748
    %v789 = vunpack.c.l.b16 %v749
    %v790 = vunpack.c.l.b16 %v750
    %v791 = vunpack.c.l.b16 %v751
    %v792 = vunpack.c.l.b16 %v752
    %v793 = vunpack.c.l.b16 %v753
    %v794 = vunpack.c.l.b16 %v754
    %v795 = vunpack.c.l.b16 %v755
    %v796 = vunpack.c.l.b16 %v756
    %v797 = vunpack.c.l.b16 %v757
    %v798 = vunpack.c.l.b16 %v758
    %v799 = vunpack.c.l.b16 %v759
    %v800 = vunpack.c.l.b16 %v760
    %v801 = vunpack.c.l.b16 %v761
    %v802 = vpack.c.b16 %v787, %v786
    %v803 = vpack.c.b16 %v789, %v788
    %v804 = vpack.c.b16 %v791, %v790
    %v805 = vpack.c.b16 %v793, %v792
    %v806 = vpack.c.b16 %v795, %v794
    %v807 = vpack.c.b16 %v797, %v796
    %v808 = vpack.c.b16 %v799, %v798
    %v809 = vpack.c.b16 %v801, %v800
    %818 = vmatprep.subr.bf16.mxu0 0
    %819 = vmatpush1.bf16.msra.mxu0 %v802
    %820 = vmatprep.subr.bf16.mxu0 0
    %821 = vmatpush1.bf16.msra.mxu0 %v803
    %822 = vmatprep.subr.bf16.mxu0 0
    %823 = vmatpush1.bf16.msra.mxu0 %v804
    %824 = vmatprep.subr.bf16.mxu0 0
    %825 = vmatpush1.bf16.msra.mxu0 %v805
    %826 = vmatprep.subr.bf16.mxu0 0
    %827 = vmatpush1.bf16.msra.mxu0 %v806
    %828 = vmatprep.subr.bf16.mxu0 0
    %829 = vmatpush1.bf16.msra.mxu0 %v807
    %830 = vmatprep.subr.bf16.mxu0 0
    %831 = vmatpush1.bf16.msra.mxu0 %v808
    %832 = vmatprep.subr.bf16.mxu0 0
    %833 = vmatpush1.bf16.msra.mxu0 %v809
    %834 = vmatprep.subr.bf16.mxu0 0
    %835 = vmatpush1.bf16.msra.mxu0 0
    %836 = vmatprep.subr.bf16.mxu0 0
    %837 = vmatpush1.bf16.msra.mxu0 0
    %838 = vmatprep.subr.bf16.mxu0 0
    %839 = vmatpush1.bf16.msra.mxu0 0
    %840 = vmatprep.subr.bf16.mxu0 0
    %841 = vmatpush1.bf16.msra.mxu0 0
    %842 = vmatprep.subr.bf16.mxu0 0
    %843 = vmatpush1.bf16.msra.mxu0 0
    %844 = vmatprep.subr.bf16.mxu0 0
    %845 = vmatpush1.bf16.msra.mxu0 0
    %846 = vmatprep.subr.bf16.mxu0 0
    %847 = vmatpush1.bf16.msra.mxu0 0
    %848 = vmatprep.subr.bf16.mxu0 0
    %849 = vmatpush1.bf16.msra.mxu0 0
    %850 = vmatprep.mubr.bf16.mxu0 0
    %851 = vmatmul.mubr.bf16.gmra.mrb[0].mxu0 %v744
    %v852 = vpop.f32.mrb[0].mxu0
    %v853 = vadd.f32 %v768, %v852
    %v854 = vpop.f32.mrb[0].mxu0
    %v855 = vpop.f32.mrb[0].mxu0
    %v856 = vadd.f32 %v768, %v855
    %v857 = vpop.f32.mrb[0].mxu0
    %858 = vdwg.mxu0
    %v859 = vtanh.pop %v853
    %v860 = vtanh.pop %v856
    %v861 = vpack.c.bf16 %v860, %v859
    %s862 = scalar_lea.vmem [#allocation8], 128
    %v863 = vld [vmem:[%s862] sm:$0xf]
    %v864 = vld [vmem:[%s862 + $0x4] sm:$0xf]
    %v865 = vld [vmem:[%s862 + $0x8] sm:$0xf]
    %v866 = vld [vmem:[%s862 + $0xc] sm:$0xf]
    %v867 = vld [vmem:[%s862 + $0x10] sm:$0xf]
    %v868 = vld [vmem:[%s862 + $0x14] sm:$0xf]
    %v869 = vld [vmem:[%s862 + $0x18] sm:$0xf]
    %v870 = vld [vmem:[%s862 + $0x1c] sm:$0xf]
    %v871 = vld [vmem:[%s862 + $0x20] sm:$0xf]
    %v872 = vld [vmem:[%s862 + $0x24] sm:$0xf]
    %v873 = vld [vmem:[%s862 + $0x28] sm:$0xf]
    %v874 = vld [vmem:[%s862 + $0x2c] sm:$0xf]
    %v875 = vld [vmem:[%s862 + $0x30] sm:$0xf]
    %v876 = vld [vmem:[%s862 + $0x34] sm:$0xf]
    %v877 = vld [vmem:[%s862 + $0x38] sm:$0xf]
    %v878 = vld [vmem:[%s862 + $0x3c] sm:$0xf]
    %s879 = scalar_lea.vmem %s6, 2
    %v880 = vld [vmem:[%s879] sm:$0x1]
    %v882 = vlaneseq
    %v883 = vshrl.u32 %v882, 7
    %v884 = vsub.s32 0, %v883
    %v885 = vrot.slane %v880, %v884
    %v903 = vunpack.c.l.b16 %v863
    %v904 = vunpack.c.l.b16 %v864
    %v905 = vunpack.c.l.b16 %v865
    %v906 = vunpack.c.l.b16 %v866
    %v907 = vunpack.c.l.b16 %v867
    %v908 = vunpack.c.l.b16 %v868
    %v909 = vunpack.c.l.b16 %v869
    %v910 = vunpack.c.l.b16 %v870
    %v911 = vunpack.c.l.b16 %v871
    %v912 = vunpack.c.l.b16 %v872
    %v913 = vunpack.c.l.b16 %v873
    %v914 = vunpack.c.l.b16 %v874
    %v915 = vunpack.c.l.b16 %v875
    %v916 = vunpack.c.l.b16 %v876
    %v917 = vunpack.c.l.b16 %v877
    %v918 = vunpack.c.l.b16 %v878
    %v919 = vpack.c.b16 %v904, %v903
    %v920 = vpack.c.b16 %v906, %v905
    %v921 = vpack.c.b16 %v908, %v907
    %v922 = vpack.c.b16 %v910, %v909
    %v923 = vpack.c.b16 %v912, %v911
    %v924 = vpack.c.b16 %v914, %v913
    %v925 = vpack.c.b16 %v916, %v915
    %v926 = vpack.c.b16 %v918, %v917
    %935 = vmatprep.subr.bf16.mxu0 0
    %936 = vmatpush1.bf16.msra.mxu0 %v919
    %937 = vmatprep.subr.bf16.mxu0 0
    %938 = vmatpush1.bf16.msra.mxu0 %v920
    %939 = vmatprep.subr.bf16.mxu0 0
    %940 = vmatpush1.bf16.msra.mxu0 %v921
    %941 = vmatprep.subr.bf16.mxu0 0
    %942 = vmatpush1.bf16.msra.mxu0 %v922
    %943 = vmatprep.subr.bf16.mxu0 0
    %944 = vmatpush1.bf16.msra.mxu0 %v923
    %945 = vmatprep.subr.bf16.mxu0 0
    %946 = vmatpush1.bf16.msra.mxu0 %v924
    %947 = vmatprep.subr.bf16.mxu0 0
    %948 = vmatpush1.bf16.msra.mxu0 %v925
    %949 = vmatprep.subr.bf16.mxu0 0
    %950 = vmatpush1.bf16.msra.mxu0 %v926
    %951 = vmatprep.subr.bf16.mxu0 0
    %952 = vmatpush1.bf16.msra.mxu0 0
    %953 = vmatprep.subr.bf16.mxu0 0
    %954 = vmatpush1.bf16.msra.mxu0 0
    %955 = vmatprep.subr.bf16.mxu0 0
    %956 = vmatpush1.bf16.msra.mxu0 0
    %957 = vmatprep.subr.bf16.mxu0 0
    %958 = vmatpush1.bf16.msra.mxu0 0
    %959 = vmatprep.subr.bf16.mxu0 0
    %960 = vmatpush1.bf16.msra.mxu0 0
    %961 = vmatprep.subr.bf16.mxu0 0
    %962 = vmatpush1.bf16.msra.mxu0 0
    %963 = vmatprep.subr.bf16.mxu0 0
    %964 = vmatpush1.bf16.msra.mxu0 0
    %965 = vmatprep.subr.bf16.mxu0 0
    %966 = vmatpush1.bf16.msra.mxu0 0
    %967 = vmatprep.mubr.bf16.mxu0 0
    %968 = vmatmul.mubr.bf16.gmra.mrb[0].mxu0 %v861
    %v969 = vpop.f32.mrb[0].mxu0
    %v970 = vadd.f32 %v885, %v969
    %v971 = vpop.f32.mrb[0].mxu0
    %v972 = vpop.f32.mrb[0].mxu0
    %v973 = vadd.f32 %v885, %v972
    %v974 = vpop.f32.mrb[0].mxu0
    %975 = vdwg.mxu0
    %v976 = vtanh.pop %v970
    %v977 = vtanh.pop %v973
    %978 = vst [vmem:[#allocation10 + $0x10] sm:$0xff] %v976
    %979 = vst [vmem:[#allocation10 + $0x28] sm:$0xff] %v977
    %s980 = scalar_lea.vmem [#allocation5], 24
    %v981 = vld [vmem:[%s980] sm:$0xf]
    %v982 = vld [vmem:[%s980 + $0x4] sm:$0xf]
    %s983 = scalar_lea.vmem %s2, 3
    %v984 = vld [vmem:[%s983] sm:$0x1]
    %v986 = vlaneseq
    %v987 = vshrl.u32 %v986, 7
    %v988 = vsub.s32 0, %v987
    %v989 = vrot.slane %v984, %v988
    %v993 = vunpack.c.l.b16 %v981
    %v994 = vunpack.c.l.b16 %v982
    %v995 = vpack.c.b16 %v994, %v993
    %997 = vmatprep.subr.bf16.mxu0 0
    %998 = vmatpush1.bf16.msra.mxu0 %v995
    %999 = vmatprep.subr.bf16.mxu0 0
    %1000 = vmatpush1.bf16.msra.mxu0 0
    %1001 = vmatprep.subr.bf16.mxu0 0
    %1002 = vmatpush1.bf16.msra.mxu0 0
    %1003 = vmatprep.subr.bf16.mxu0 0
    %1004 = vmatpush1.bf16.msra.mxu0 0
    %1005 = vmatprep.subr.bf16.mxu0 0
    %1006 = vmatpush1.bf16.msra.mxu0 0
    %1007 = vmatprep.subr.bf16.mxu0 0
    %1008 = vmatpush1.bf16.msra.mxu0 0
    %1009 = vmatprep.subr.bf16.mxu0 0
    %1010 = vmatpush1.bf16.msra.mxu0 0
    %1011 = vmatprep.subr.bf16.mxu0 0
    %1012 = vmatpush1.bf16.msra.mxu0 0
    %1013 = vmatprep.subr.bf16.mxu0 0
    %1014 = vmatpush1.bf16.msra.mxu0 0
    %1015 = vmatprep.subr.bf16.mxu0 0
    %1016 = vmatpush1.bf16.msra.mxu0 0
    %1017 = vmatprep.subr.bf16.mxu0 0
    %1018 = vmatpush1.bf16.msra.mxu0 0
    %1019 = vmatprep.subr.bf16.mxu0 0
    %1020 = vmatpush1.bf16.msra.mxu0 0
    %1021 = vmatprep.subr.bf16.mxu0 0
    %1022 = vmatpush1.bf16.msra.mxu0 0
    %1023 = vmatprep.subr.bf16.mxu0 0
    %1024 = vmatpush1.bf16.msra.mxu0 0
    %1025 = vmatprep.subr.bf16.mxu0 0
    %1026 = vmatpush1.bf16.msra.mxu0 0
    %1027 = vmatprep.subr.bf16.mxu0 0
    %1028 = vmatpush1.bf16.msra.mxu0 0
    %1029 = vmatprep.mubr.bf16.mxu0 0
    %1030 = vmatmul.mubr.bf16.gmra.mrb[0].mxu0 %v111
    %v1031 = vpop.f32.mrb[0].mxu0
    %v1032 = vadd.f32 %v989, %v1031
    %v1033 = vpop.f32.mrb[0].mxu0
    %v1034 = vpop.f32.mrb[0].mxu0
    %v1035 = vadd.f32 %v989, %v1034
    %v1036 = vpop.f32.mrb[0].mxu0
    %1037 = vdwg.mxu0
    %v1038 = vtanh.pop %v1032
    %v1039 = vtanh.pop %v1035
    %v1040 = vpack.c.bf16 %v1039, %v1038
    %s1041 = scalar_lea.vmem [#allocation7], 192
    %v1042 = vld [vmem:[%s1041] sm:$0xf]
    %v1043 = vld [vmem:[%s1041 + $0x4] sm:$0xf]
    %v1044 = vld [vmem:[%s1041 + $0x8] sm:$0xf]
    %v1045 = vld [vmem:[%s1041 + $0xc] sm:$0xf]
    %v1046 = vld [vmem:[%s1041 + $0x10] sm:$0xf]
    %v1047 = vld [vmem:[%s1041 + $0x14] sm:$0xf]
    %v1048 = vld [vmem:[%s1041 + $0x18] sm:$0xf]
    %v1049 = vld [vmem:[%s1041 + $0x1c] sm:$0xf]
    %v1050 = vld [vmem:[%s1041 + $0x20] sm:$0xf]
    %v1051 = vld [vmem:[%s1041 + $0x24] sm:$0xf]
    %v1052 = vld [vmem:[%s1041 + $0x28] sm:$0xf]
    %v1053 = vld [vmem:[%s1041 + $0x2c] sm:$0xf]
    %v1054 = vld [vmem:[%s1041 + $0x30] sm:$0xf]
    %v1055 = vld [vmem:[%s1041 + $0x34] sm:$0xf]
    %v1056 = vld [vmem:[%s1041 + $0x38] sm:$0xf]
    %v1057 = vld [vmem:[%s1041 + $0x3c] sm:$0xf]
    %s1058 = scalar_lea.vmem %s4, 3
    %v1059 = vld [vmem:[%s1058] sm:$0x1]
    %v1061 = vlaneseq
    %v1062 = vshrl.u32 %v1061, 7
    %v1063 = vsub.s32 0, %v1062
    %v1064 = vrot.slane %v1059, %v1063
    %v1082 = vunpack.c.l.b16 %v1042
    %v1083 = vunpack.c.l.b16 %v1043
    %v1084 = vunpack.c.l.b16 %v1044
    %v1085 = vunpack.c.l.b16 %v1045
    %v1086 = vunpack.c.l.b16 %v1046
    %v1087 = vunpack.c.l.b16 %v1047
    %v1088 = vunpack.c.l.b16 %v1048
    %v1089 = vunpack.c.l.b16 %v1049
    %v1090 = vunpack.c.l.b16 %v1050
    %v1091 = vunpack.c.l.b16 %v1051
    %v1092 = vunpack.c.l.b16 %v1052
    %v1093 = vunpack.c.l.b16 %v1053
    %v1094 = vunpack.c.l.b16 %v1054
    %v1095 = vunpack.c.l.b16 %v1055
    %v1096 = vunpack.c.l.b16 %v1056
    %v1097 = vunpack.c.l.b16 %v1057
    %v1098 = vpack.c.b16 %v1083, %v1082
    %v1099 = vpack.c.b16 %v1085, %v1084
    %v1100 = vpack.c.b16 %v1087, %v1086
    %v1101 = vpack.c.b16 %v1089, %v1088
    %v1102 = vpack.c.b16 %v1091, %v1090
    %v1103 = vpack.c.b16 %v1093, %v1092
    %v1104 = vpack.c.b16 %v1095, %v1094
    %v1105 = vpack.c.b16 %v1097, %v1096
    %1114 = vmatprep.subr.bf16.mxu0 0
    %1115 = vmatpush1.bf16.msra.mxu0 %v1098
    %1116 = vmatprep.subr.bf16.mxu0 0
    %1117 = vmatpush1.bf16.msra.mxu0 %v1099
    %1118 = vmatprep.subr.bf16.mxu0 0
    %1119 = vmatpush1.bf16.msra.mxu0 %v1100
    %1120 = vmatprep.subr.bf16.mxu0 0
    %1121 = vmatpush1.bf16.msra.mxu0 %v1101
    %1122 = vmatprep.subr.bf16.mxu0 0
    %1123 = vmatpush1.bf16.msra.mxu0 %v1102
    %1124 = vmatprep.subr.bf16.mxu0 0
    %1125 = vmatpush1.bf16.msra.mxu0 %v1103
    %1126 = vmatprep.subr.bf16.mxu0 0
    %1127 = vmatpush1.bf16.msra.mxu0 %v1104
    %1128 = vmatprep.subr.bf16.mxu0 0
    %1129 = vmatpush1.bf16.msra.mxu0 %v1105
    %1130 = vmatprep.subr.bf16.mxu0 0
    %1131 = vmatpush1.bf16.msra.mxu0 0
    %1132 = vmatprep.subr.bf16.mxu0 0
    %1133 = vmatpush1.bf16.msra.mxu0 0
    %1134 = vmatprep.subr.bf16.mxu0 0
    %1135 = vmatpush1.bf16.msra.mxu0 0
    %1136 = vmatprep.subr.bf16.mxu0 0
    %1137 = vmatpush1.bf16.msra.mxu0 0
    %1138 = vmatprep.subr.bf16.mxu0 0
    %1139 = vmatpush1.bf16.msra.mxu0 0
    %1140 = vmatprep.subr.bf16.mxu0 0
    %1141 = vmatpush1.bf16.msra.mxu0 0
    %1142 = vmatprep.subr.bf16.mxu0 0
    %1143 = vmatpush1.bf16.msra.mxu0 0
    %1144 = vmatprep.subr.bf16.mxu0 0
    %1145 = vmatpush1.bf16.msra.mxu0 0
    %1146 = vmatprep.mubr.bf16.mxu0 0
    %1147 = vmatmul.mubr.bf16.gmra.mrb[0].mxu0 %v1040
    %v1148 = vpop.f32.mrb[0].mxu0
    %v1149 = vadd.f32 %v1064, %v1148
    %v1150 = vpop.f32.mrb[0].mxu0
    %v1151 = vpop.f32.mrb[0].mxu0
    %v1152 = vadd.f32 %v1064, %v1151
    %v1153 = vpop.f32.mrb[0].mxu0
    %1154 = vdwg.mxu0
    %v1155 = vtanh.pop %v1149
    %v1156 = vtanh.pop %v1152
    %v1157 = vpack.c.bf16 %v1156, %v1155
    %s1158 = scalar_lea.vmem [#allocation8], 192
    %v1159 = vld [vmem:[%s1158] sm:$0xf]
    %v1160 = vld [vmem:[%s1158 + $0x4] sm:$0xf]
    %v1161 = vld [vmem:[%s1158 + $0x8] sm:$0xf]
    %v1162 = vld [vmem:[%s1158 + $0xc] sm:$0xf]
    %v1163 = vld [vmem:[%s1158 + $0x10] sm:$0xf]
    %v1164 = vld [vmem:[%s1158 + $0x14] sm:$0xf]
    %v1165 = vld [vmem:[%s1158 + $0x18] sm:$0xf]
    %v1166 = vld [vmem:[%s1158 + $0x1c] sm:$0xf]
    %v1167 = vld [vmem:[%s1158 + $0x20] sm:$0xf]
    %v1168 = vld [vmem:[%s1158 + $0x24] sm:$0xf]
    %v1169 = vld [vmem:[%s1158 + $0x28] sm:$0xf]
    %v1170 = vld [vmem:[%s1158 + $0x2c] sm:$0xf]
    %v1171 = vld [vmem:[%s1158 + $0x30] sm:$0xf]
    %v1172 = vld [vmem:[%s1158 + $0x34] sm:$0xf]
    %v1173 = vld [vmem:[%s1158 + $0x38] sm:$0xf]
    %v1174 = vld [vmem:[%s1158 + $0x3c] sm:$0xf]
    %s1175 = scalar_lea.vmem %s6, 3
    %v1176 = vld [vmem:[%s1175] sm:$0x1]
    %v1178 = vlaneseq
    %v1179 = vshrl.u32 %v1178, 7
    %v1180 = vsub.s32 0, %v1179
    %v1181 = vrot.slane %v1176, %v1180
    %v1199 = vunpack.c.l.b16 %v1159
    %v1200 = vunpack.c.l.b16 %v1160
    %v1201 = vunpack.c.l.b16 %v1161
    %v1202 = vunpack.c.l.b16 %v1162
    %v1203 = vunpack.c.l.b16 %v1163
    %v1204 = vunpack.c.l.b16 %v1164
    %v1205 = vunpack.c.l.b16 %v1165
    %v1206 = vunpack.c.l.b16 %v1166
    %v1207 = vunpack.c.l.b16 %v1167
    %v1208 = vunpack.c.l.b16 %v1168
    %v1209 = vunpack.c.l.b16 %v1169
    %v1210 = vunpack.c.l.b16 %v1170
    %v1211 = vunpack.c.l.b16 %v1171
    %v1212 = vunpack.c.l.b16 %v1172
    %v1213 = vunpack.c.l.b16 %v1173
    %v1214 = vunpack.c.l.b16 %v1174
    %v1215 = vpack.c.b16 %v1200, %v1199
    %v1216 = vpack.c.b16 %v1202, %v1201
    %v1217 = vpack.c.b16 %v1204, %v1203
    %v1218 = vpack.c.b16 %v1206, %v1205
    %v1219 = vpack.c.b16 %v1208, %v1207
    %v1220 = vpack.c.b16 %v1210, %v1209
    %v1221 = vpack.c.b16 %v1212, %v1211
    %v1222 = vpack.c.b16 %v1214, %v1213
    %1231 = vmatprep.subr.bf16.mxu0 0
    %1232 = vmatpush1.bf16.msra.mxu0 %v1215
    %1233 = vmatprep.subr.bf16.mxu0 0
    %1234 = vmatpush1.bf16.msra.mxu0 %v1216
    %1235 = vmatprep.subr.bf16.mxu0 0
    %1236 = vmatpush1.bf16.msra.mxu0 %v1217
    %1237 = vmatprep.subr.bf16.mxu0 0
    %1238 = vmatpush1.bf16.msra.mxu0 %v1218
    %1239 = vmatprep.subr.bf16.mxu0 0
    %1240 = vmatpush1.bf16.msra.mxu0 %v1219
    %1241 = vmatprep.subr.bf16.mxu0 0
    %1242 = vmatpush1.bf16.msra.mxu0 %v1220
    %1243 = vmatprep.subr.bf16.mxu0 0
    %1244 = vmatpush1.bf16.msra.mxu0 %v1221
    %1245 = vmatprep.subr.bf16.mxu0 0
    %1246 = vmatpush1.bf16.msra.mxu0 %v1222
    %1247 = vmatprep.subr.bf16.mxu0 0
    %1248 = vmatpush1.bf16.msra.mxu0 0
    %1249 = vmatprep.subr.bf16.mxu0 0
    %1250 = vmatpush1.bf16.msra.mxu0 0
    %1251 = vmatprep.subr.bf16.mxu0 0
    %1252 = vmatpush1.bf16.msra.mxu0 0
    %1253 = vmatprep.subr.bf16.mxu0 0
    %1254 = vmatpush1.bf16.msra.mxu0 0
    %1255 = vmatprep.subr.bf16.mxu0 0
    %1256 = vmatpush1.bf16.msra.mxu0 0
    %1257 = vmatprep.subr.bf16.mxu0 0
    %1258 = vmatpush1.bf16.msra.mxu0 0
    %1259 = vmatprep.subr.bf16.mxu0 0
    %1260 = vmatpush1.bf16.msra.mxu0 0
    %1261 = vmatprep.subr.bf16.mxu0 0
    %1262 = vmatpush1.bf16.msra.mxu0 0
    %1263 = vmatprep.mubr.bf16.mxu0 0
    %1264 = vmatmul.mubr.bf16.gmra.mrb[0].mxu0 %v1157
    %v1265 = vpop.f32.mrb[0].mxu0
    %v1266 = vadd.f32 %v1181, %v1265
    %v1267 = vpop.f32.mrb[0].mxu0
    %v1268 = vpop.f32.mrb[0].mxu0
    %v1269 = vadd.f32 %v1181, %v1268
    %v1270 = vpop.f32.mrb[0].mxu0
    %1271 = vdwg.mxu0
    %v1272 = vand.u32 2147483647, %v1266
    %v1273 = vand.u32 2147483647, %v1269
    %v1274 = vsub.f32 0.0, %v1272
    %v1275 = vsub.f32 0.0, %v1273
    %v1276 = vmul.f32 %v1274, 1.442695
    %v1277 = vpow.pop %v1276
    %v1278 = vmul.f32 %v1275, 1.442695
    %v1279 = vpow.pop %v1278
    %v1280 = vadd.f32 %v1277, 1.0
    %v1281 = vadd.f32 %v1279, 1.0
    %v1282 = vrcp.pop %v1280
    %v1283 = vrcp.pop %v1281
    %vm1284 = vcmp.ge.f32.partialorder %v1266, 0.0
    %vm1285 = vcmp.ge.f32.partialorder %v1269, 0.0
    %v1286 = vmul.f32 %v1277, %v1282
    %v1287 = vmul.f32 %v1279, %v1283
    %v1288 = vsel %vm1284, %v1282, %v1286
    %v1289 = vsel %vm1285, %v1283, %v1287
    %1290 = vst [vmem:[#allocation11] sm:$0xff] %v1288
    %1291 = vst [vmem:[#allocation11 + $0x18] sm:$0xff] %v1289
    %s1292 = scalar_lea.vmem [#allocation5], 32
    %v1293 = vld [vmem:[%s1292] sm:$0xf]
    %v1294 = vld [vmem:[%s1292 + $0x4] sm:$0xf]
    %s1295 = scalar_lea.vmem %s2, 4
    %v1296 = vld [vmem:[%s1295] sm:$0x1]
    %v1298 = vlaneseq
    %v1299 = vshrl.u32 %v1298, 7
    %v1300 = vsub.s32 0, %v1299
    %v1301 = vrot.slane %v1296, %v1300
    %v1305 = vunpack.c.l.b16 %v1293
    %v1306 = vunpack.c.l.b16 %v1294
    %v1307 = vpack.c.b16 %v1306, %v1305
    %1309 = vmatprep.subr.bf16.mxu0 0
    %1310 = vmatpush1.bf16.msra.mxu0 %v1307
    %1311 = vmatprep.subr.bf16.mxu0 0
    %1312 = vmatpush1.bf16.msra.mxu0 0
    %1313 = vmatprep.subr.bf16.mxu0 0
    %1314 = vmatpush1.bf16.msra.mxu0 0
    %1315 = vmatprep.subr.bf16.mxu0 0
    %1316 = vmatpush1.bf16.msra.mxu0 0
    %1317 = vmatprep.subr.bf16.mxu0 0
    %1318 = vmatpush1.bf16.msra.mxu0 0
    %1319 = vmatprep.subr.bf16.mxu0 0
    %1320 = vmatpush1.bf16.msra.mxu0 0
    %1321 = vmatprep.subr.bf16.mxu0 0
    %1322 = vmatpush1.bf16.msra.mxu0 0
    %1323 = vmatprep.subr.bf16.mxu0 0
    %1324 = vmatpush1.bf16.msra.mxu0 0
    %1325 = vmatprep.subr.bf16.mxu0 0
    %1326 = vmatpush1.bf16.msra.mxu0 0
    %1327 = vmatprep.subr.bf16.mxu0 0
    %1328 = vmatpush1.bf16.msra.mxu0 0
    %1329 = vmatprep.subr.bf16.mxu0 0
    %1330 = vmatpush1.bf16.msra.mxu0 0
    %1331 = vmatprep.subr.bf16.mxu0 0
    %1332 = vmatpush1.bf16.msra.mxu0 0
    %1333 = vmatprep.subr.bf16.mxu0 0
    %1334 = vmatpush1.bf16.msra.mxu0 0
    %1335 = vmatprep.subr.bf16.mxu0 0
    %1336 = vmatpush1.bf16.msra.mxu0 0
    %1337 = vmatprep.subr.bf16.mxu0 0
    %1338 = vmatpush1.bf16.msra.mxu0 0
    %1339 = vmatprep.subr.bf16.mxu0 0
    %1340 = vmatpush1.bf16.msra.mxu0 0
    %1341 = vmatprep.mubr.bf16.mxu0 0
    %1342 = vmatmul.mubr.bf16.gmra.mrb[0].mxu0 %v111
    %v1343 = vpop.f32.mrb[0].mxu0
    %v1344 = vadd.f32 %v1301, %v1343
    %v1345 = vpop.f32.mrb[0].mxu0
    %v1346 = vpop.f32.mrb[0].mxu0
    %v1347 = vadd.f32 %v1301, %v1346
    %v1348 = vpop.f32.mrb[0].mxu0
    %1349 = vdwg.mxu0
    %v1350 = vtanh.pop %v1344
    %v1351 = vtanh.pop %v1347
    %v1352 = vpack.c.bf16 %v1351, %v1350
    %s1353 = scalar_lea.vmem [#allocation7], 256
    %v1354 = vld [vmem:[%s1353] sm:$0xf]
    %v1355 = vld [vmem:[%s1353 + $0x4] sm:$0xf]
    %v1356 = vld [vmem:[%s1353 + $0x8] sm:$0xf]
    %v1357 = vld [vmem:[%s1353 + $0xc] sm:$0xf]
    %v1358 = vld [vmem:[%s1353 + $0x10] sm:$0xf]
    %v1359 = vld [vmem:[%s1353 + $0x14] sm:$0xf]
    %v1360 = vld [vmem:[%s1353 + $0x18] sm:$0xf]
    %v1361 = vld [vmem:[%s1353 + $0x1c] sm:$0xf]
    %v1362 = vld [vmem:[%s1353 + $0x20] sm:$0xf]
    %v1363 = vld [vmem:[%s1353 + $0x24] sm:$0xf]
    %v1364 = vld [vmem:[%s1353 + $0x28] sm:$0xf]
    %v1365 = vld [vmem:[%s1353 + $0x2c] sm:$0xf]
    %v1366 = vld [vmem:[%s1353 + $0x30] sm:$0xf]
    %v1367 = vld [vmem:[%s1353 + $0x34] sm:$0xf]
    %v1368 = vld [vmem:[%s1353 + $0x38] sm:$0xf]
    %v1369 = vld [vmem:[%s1353 + $0x3c] sm:$0xf]
    %s1370 = scalar_lea.vmem %s4, 4
    %v1371 = vld [vmem:[%s1370] sm:$0x1]
    %v1373 = vlaneseq
    %v1374 = vshrl.u32 %v1373, 7
    %v1375 = vsub.s32 0, %v1374
    %v1376 = vrot.slane %v1371, %v1375
    %v1394 = vunpack.c.l.b16 %v1354
    %v1395 = vunpack.c.l.b16 %v1355
    %v1396 = vunpack.c.l.b16 %v1356
    %v1397 = vunpack.c.l.b16 %v1357
    %v1398 = vunpack.c.l.b16 %v1358
    %v1399 = vunpack.c.l.b16 %v1359
    %v1400 = vunpack.c.l.b16 %v1360
    %v1401 = vunpack.c.l.b16 %v1361
    %v1402 = vunpack.c.l.b16 %v1362
    %v1403 = vunpack.c.l.b16 %v1363
    %v1404 = vunpack.c.l.b16 %v1364
    %v1405 = vunpack.c.l.b16 %v1365
    %v1406 = vunpack.c.l.b16 %v1366
    %v1407 = vunpack.c.l.b16 %v1367
    %v1408 = vunpack.c.l.b16 %v1368
    %v1409 = vunpack.c.l.b16 %v1369
    %v1410 = vpack.c.b16 %v1395, %v1394
    %v1411 = vpack.c.b16 %v1397, %v1396
    %v1412 = vpack.c.b16 %v1399, %v1398
    %v1413 = vpack.c.b16 %v1401, %v1400
    %v1414 = vpack.c.b16 %v1403, %v1402
    %v1415 = vpack.c.b16 %v1405, %v1404
    %v1416 = vpack.c.b16 %v1407, %v1406
    %v1417 = vpack.c.b16 %v1409, %v1408
    %1426 = vmatprep.subr.bf16.mxu0 0
    %1427 = vmatpush1.bf16.msra.mxu0 %v1410
    %1428 = vmatprep.subr.bf16.mxu0 0
    %1429 = vmatpush1.bf16.msra.mxu0 %v1411
    %1430 = vmatprep.subr.bf16.mxu0 0
    %1431 = vmatpush1.bf16.msra.mxu0 %v1412
    %1432 = vmatprep.subr.bf16.mxu0 0
    %1433 = vmatpush1.bf16.msra.mxu0 %v1413
    %1434 = vmatprep.subr.bf16.mxu0 0
    %1435 = vmatpush1.bf16.msra.mxu0 %v1414
    %1436 = vmatprep.subr.bf16.mxu0 0
    %1437 = vmatpush1.bf16.msra.mxu0 %v1415
    %1438 = vmatprep.subr.bf16.mxu0 0
    %1439 = vmatpush1.bf16.msra.mxu0 %v1416
    %1440 = vmatprep.subr.bf16.mxu0 0
    %1441 = vmatpush1.bf16.msra.mxu0 %v1417
    %1442 = vmatprep.subr.bf16.mxu0 0
    %1443 = vmatpush1.bf16.msra.mxu0 0
    %1444 = vmatprep.subr.bf16.mxu0 0
    %1445 = vmatpush1.bf16.msra.mxu0 0
    %1446 = vmatprep.subr.bf16.mxu0 0
    %1447 = vmatpush1.bf16.msra.mxu0 0
    %1448 = vmatprep.subr.bf16.mxu0 0
    %1449 = vmatpush1.bf16.msra.mxu0 0
    %1450 = vmatprep.subr.bf16.mxu0 0
    %1451 = vmatpush1.bf16.msra.mxu0 0
    %1452 = vmatprep.subr.bf16.mxu0 0
    %1453 = vmatpush1.bf16.msra.mxu0 0
    %1454 = vmatprep.subr.bf16.mxu0 0
    %1455 = vmatpush1.bf16.msra.mxu0 0
    %1456 = vmatprep.subr.bf16.mxu0 0
    %1457 = vmatpush1.bf16.msra.mxu0 0
    %1458 = vmatprep.mubr.bf16.mxu0 0
    %1459 = vmatmul.mubr.bf16.gmra.mrb[0].mxu0 %v1352
    %v1460 = vpop.f32.mrb[0].mxu0
    %v1461 = vadd.f32 %v1376, %v1460
    %v1462 = vpop.f32.mrb[0].mxu0
    %v1463 = vpop.f32.mrb[0].mxu0
    %v1464 = vadd.f32 %v1376, %v1463
    %v1465 = vpop.f32.mrb[0].mxu0
    %1466 = vdwg.mxu0
    %v1467 = vtanh.pop %v1461
    %v1468 = vtanh.pop %v1464
    %v1469 = vpack.c.bf16 %v1468, %v1467
    %s1470 = scalar_lea.vmem [#allocation8], 256
    %v1471 = vld [vmem:[%s1470] sm:$0xf]
    %v1472 = vld [vmem:[%s1470 + $0x4] sm:$0xf]
    %v1473 = vld [vmem:[%s1470 + $0x8] sm:$0xf]
    %v1474 = vld [vmem:[%s1470 + $0xc] sm:$0xf]
    %v1475 = vld [vmem:[%s1470 + $0x10] sm:$0xf]
    %v1476 = vld [vmem:[%s1470 + $0x14] sm:$0xf]
    %v1477 = vld [vmem:[%s1470 + $0x18] sm:$0xf]
    %v1478 = vld [vmem:[%s1470 + $0x1c] sm:$0xf]
    %v1479 = vld [vmem:[%s1470 + $0x20] sm:$0xf]
    %v1480 = vld [vmem:[%s1470 + $0x24] sm:$0xf]
    %v1481 = vld [vmem:[%s1470 + $0x28] sm:$0xf]
    %v1482 = vld [vmem:[%s1470 + $0x2c] sm:$0xf]
    %v1483 = vld [vmem:[%s1470 + $0x30] sm:$0xf]
    %v1484 = vld [vmem:[%s1470 + $0x34] sm:$0xf]
    %v1485 = vld [vmem:[%s1470 + $0x38] sm:$0xf]
    %v1486 = vld [vmem:[%s1470 + $0x3c] sm:$0xf]
    %s1487 = scalar_lea.vmem %s6, 4
    %v1488 = vld [vmem:[%s1487] sm:$0x1]
    %v1490 = vlaneseq
    %v1491 = vshrl.u32 %v1490, 7
    %v1492 = vsub.s32 0, %v1491
    %v1493 = vrot.slane %v1488, %v1492
    %v1511 = vunpack.c.l.b16 %v1471
    %v1512 = vunpack.c.l.b16 %v1472
    %v1513 = vunpack.c.l.b16 %v1473
    %v1514 = vunpack.c.l.b16 %v1474
    %v1515 = vunpack.c.l.b16 %v1475
    %v1516 = vunpack.c.l.b16 %v1476
    %v1517 = vunpack.c.l.b16 %v1477
    %v1518 = vunpack.c.l.b16 %v1478
    %v1519 = vunpack.c.l.b16 %v1479
    %v1520 = vunpack.c.l.b16 %v1480
    %v1521 = vunpack.c.l.b16 %v1481
    %v1522 = vunpack.c.l.b16 %v1482
    %v1523 = vunpack.c.l.b16 %v1483
    %v1524 = vunpack.c.l.b16 %v1484
    %v1525 = vunpack.c.l.b16 %v1485
    %v1526 = vunpack.c.l.b16 %v1486
    %v1527 = vpack.c.b16 %v1512, %v1511
    %v1528 = vpack.c.b16 %v1514, %v1513
    %v1529 = vpack.c.b16 %v1516, %v1515
    %v1530 = vpack.c.b16 %v1518, %v1517
    %v1531 = vpack.c.b16 %v1520, %v1519
    %v1532 = vpack.c.b16 %v1522, %v1521
    %v1533 = vpack.c.b16 %v1524, %v1523
    %v1534 = vpack.c.b16 %v1526, %v1525
    %1543 = vmatprep.subr.bf16.mxu0 0
    %1544 = vmatpush1.bf16.msra.mxu0 %v1527
    %1545 = vmatprep.subr.bf16.mxu0 0
    %1546 = vmatpush1.bf16.msra.mxu0 %v1528
    %1547 = vmatprep.subr.bf16.mxu0 0
    %1548 = vmatpush1.bf16.msra.mxu0 %v1529
    %1549 = vmatprep.subr.bf16.mxu0 0
    %1550 = vmatpush1.bf16.msra.mxu0 %v1530
    %1551 = vmatprep.subr.bf16.mxu0 0
    %1552 = vmatpush1.bf16.msra.mxu0 %v1531
    %1553 = vmatprep.subr.bf16.mxu0 0
    %1554 = vmatpush1.bf16.msra.mxu0 %v1532
    %1555 = vmatprep.subr.bf16.mxu0 0
    %1556 = vmatpush1.bf16.msra.mxu0 %v1533
    %1557 = vmatprep.subr.bf16.mxu0 0
    %1558 = vmatpush1.bf16.msra.mxu0 %v1534
    %1559 = vmatprep.subr.bf16.mxu0 0
    %1560 = vmatpush1.bf16.msra.mxu0 0
    %1561 = vmatprep.subr.bf16.mxu0 0
    %1562 = vmatpush1.bf16.msra.mxu0 0
    %1563 = vmatprep.subr.bf16.mxu0 0
    %1564 = vmatpush1.bf16.msra.mxu0 0
    %1565 = vmatprep.subr.bf16.mxu0 0
    %1566 = vmatpush1.bf16.msra.mxu0 0
    %1567 = vmatprep.subr.bf16.mxu0 0
    %1568 = vmatpush1.bf16.msra.mxu0 0
    %1569 = vmatprep.subr.bf16.mxu0 0
    %1570 = vmatpush1.bf16.msra.mxu0 0
    %1571 = vmatprep.subr.bf16.mxu0 0
    %1572 = vmatpush1.bf16.msra.mxu0 0
    %1573 = vmatprep.subr.bf16.mxu0 0
    %1574 = vmatpush1.bf16.msra.mxu0 0
    %1575 = vmatprep.mubr.bf16.mxu0 0
    %1576 = vmatmul.mubr.bf16.gmra.mrb[0].mxu0 %v1469
    %v1577 = vpop.f32.mrb[0].mxu0
    %v1578 = vadd.f32 %v1493, %v1577
    %v1579 = vpop.f32.mrb[0].mxu0
    %v1580 = vpop.f32.mrb[0].mxu0
    %v1581 = vadd.f32 %v1493, %v1580
    %v1582 = vpop.f32.mrb[0].mxu0
    %1583 = vdwg.mxu0
    %v1584 = vand.u32 2147483647, %v1578
    %v1585 = vand.u32 2147483647, %v1581
    %v1586 = vsub.f32 0.0, %v1584
    %v1587 = vsub.f32 0.0, %v1585
    %v1588 = vmul.f32 %v1586, 1.442695
    %v1589 = vpow.pop %v1588
    %v1590 = vmul.f32 %v1587, 1.442695
    %v1591 = vpow.pop %v1590
    %v1592 = vadd.f32 %v1589, 1.0
    %v1593 = vadd.f32 %v1591, 1.0
    %v1594 = vrcp.pop %v1592
    %v1595 = vrcp.pop %v1593
    %vm1596 = vcmp.ge.f32.partialorder %v1578, 0.0
    %vm1597 = vcmp.ge.f32.partialorder %v1581, 0.0
    %v1598 = vmul.f32 %v1589, %v1594
    %v1599 = vmul.f32 %v1591, %v1595
    %v1600 = vsel %vm1596, %v1594, %v1598
    %v1601 = vsel %vm1597, %v1595, %v1599
    %1602 = vst [vmem:[#allocation11 + $0x8] sm:$0xff] %v1600
    %1603 = vst [vmem:[#allocation11 + $0x20] sm:$0xff] %v1601
    %s1604 = scalar_lea.vmem [#allocation5], 40
    %v1605 = vld [vmem:[%s1604] sm:$0xf]
    %v1606 = vld [vmem:[%s1604 + $0x4] sm:$0xf]
    %s1607 = scalar_lea.vmem %s2, 5
    %v1608 = vld [vmem:[%s1607] sm:$0x1]
    %v1610 = vlaneseq
    %v1611 = vshrl.u32 %v1610, 7
    %v1612 = vsub.s32 0, %v1611
    %v1613 = vrot.slane %v1608, %v1612
    %v1617 = vunpack.c.l.b16 %v1605
    %v1618 = vunpack.c.l.b16 %v1606
    %v1619 = vpack.c.b16 %v1618, %v1617
    %1621 = vmatprep.subr.bf16.mxu0 0
    %1622 = vmatpush1.bf16.msra.mxu0 %v1619
    %1623 = vmatprep.subr.bf16.mxu0 0
    %1624 = vmatpush1.bf16.msra.mxu0 0
    %1625 = vmatprep.subr.bf16.mxu0 0
    %1626 = vmatpush1.bf16.msra.mxu0 0
    %1627 = vmatprep.subr.bf16.mxu0 0
    %1628 = vmatpush1.bf16.msra.mxu0 0
    %1629 = vmatprep.subr.bf16.mxu0 0
    %1630 = vmatpush1.bf16.msra.mxu0 0
    %1631 = vmatprep.subr.bf16.mxu0 0
    %1632 = vmatpush1.bf16.msra.mxu0 0
    %1633 = vmatprep.subr.bf16.mxu0 0
    %1634 = vmatpush1.bf16.msra.mxu0 0
    %1635 = vmatprep.subr.bf16.mxu0 0
    %1636 = vmatpush1.bf16.msra.mxu0 0
    %1637 = vmatprep.subr.bf16.mxu0 0
    %1638 = vmatpush1.bf16.msra.mxu0 0
    %1639 = vmatprep.subr.bf16.mxu0 0
    %1640 = vmatpush1.bf16.msra.mxu0 0
    %1641 = vmatprep.subr.bf16.mxu0 0
    %1642 = vmatpush1.bf16.msra.mxu0 0
    %1643 = vmatprep.subr.bf16.mxu0 0
    %1644 = vmatpush1.bf16.msra.mxu0 0
    %1645 = vmatprep.subr.bf16.mxu0 0
    %1646 = vmatpush1.bf16.msra.mxu0 0
    %1647 = vmatprep.subr.bf16.mxu0 0
    %1648 = vmatpush1.bf16.msra.mxu0 0
    %1649 = vmatprep.subr.bf16.mxu0 0
    %1650 = vmatpush1.bf16.msra.mxu0 0
    %1651 = vmatprep.subr.bf16.mxu0 0
    %1652 = vmatpush1.bf16.msra.mxu0 0
    %1653 = vmatprep.mubr.bf16.mxu0 0
    %1654 = vmatmul.mubr.bf16.gmra.mrb[0].mxu0 %v111
    %v1655 = vpop.f32.mrb[0].mxu0
    %v1656 = vadd.f32 %v1613, %v1655
    %v1657 = vpop.f32.mrb[0].mxu0
    %v1658 = vpop.f32.mrb[0].mxu0
    %v1659 = vadd.f32 %v1613, %v1658
    %v1660 = vpop.f32.mrb[0].mxu0
    %1661 = vdwg.mxu0
    %v1662 = vtanh.pop %v1656
    %v1663 = vtanh.pop %v1659
    %v1664 = vpack.c.bf16 %v1663, %v1662
    %s1665 = scalar_lea.vmem [#allocation7], 320
    %v1666 = vld [vmem:[%s1665] sm:$0xf]
    %v1667 = vld [vmem:[%s1665 + $0x4] sm:$0xf]
    %v1668 = vld [vmem:[%s1665 + $0x8] sm:$0xf]
    %v1669 = vld [vmem:[%s1665 + $0xc] sm:$0xf]
    %v1670 = vld [vmem:[%s1665 + $0x10] sm:$0xf]
    %v1671 = vld [vmem:[%s1665 + $0x14] sm:$0xf]
    %v1672 = vld [vmem:[%s1665 + $0x18] sm:$0xf]
    %v1673 = vld [vmem:[%s1665 + $0x1c] sm:$0xf]
    %v1674 = vld [vmem:[%s1665 + $0x20] sm:$0xf]
    %v1675 = vld [vmem:[%s1665 + $0x24] sm:$0xf]
    %v1676 = vld [vmem:[%s1665 + $0x28] sm:$0xf]
    %v1677 = vld [vmem:[%s1665 + $0x2c] sm:$0xf]
    %v1678 = vld [vmem:[%s1665 + $0x30] sm:$0xf]
    %v1679 = vld [vmem:[%s1665 + $0x34] sm:$0xf]
    %v1680 = vld [vmem:[%s1665 + $0x38] sm:$0xf]
    %v1681 = vld [vmem:[%s1665 + $0x3c] sm:$0xf]
    %s1682 = scalar_lea.vmem %s4, 5
    %v1683 = vld [vmem:[%s1682] sm:$0x1]
    %v1685 = vlaneseq
    %v1686 = vshrl.u32 %v1685, 7
    %v1687 = vsub.s32 0, %v1686
    %v1688 = vrot.slane %v1683, %v1687
    %v1706 = vunpack.c.l.b16 %v1666
    %v1707 = vunpack.c.l.b16 %v1667
    %v1708 = vunpack.c.l.b16 %v1668
    %v1709 = vunpack.c.l.b16 %v1669
    %v1710 = vunpack.c.l.b16 %v1670
    %v1711 = vunpack.c.l.b16 %v1671
    %v1712 = vunpack.c.l.b16 %v1672
    %v1713 = vunpack.c.l.b16 %v1673
    %v1714 = vunpack.c.l.b16 %v1674
    %v1715 = vunpack.c.l.b16 %v1675
    %v1716 = vunpack.c.l.b16 %v1676
    %v1717 = vunpack.c.l.b16 %v1677
    %v1718 = vunpack.c.l.b16 %v1678
    %v1719 = vunpack.c.l.b16 %v1679
    %v1720 = vunpack.c.l.b16 %v1680
    %v1721 = vunpack.c.l.b16 %v1681
    %v1722 = vpack.c.b16 %v1707, %v1706
    %v1723 = vpack.c.b16 %v1709, %v1708
    %v1724 = vpack.c.b16 %v1711, %v1710
    %v1725 = vpack.c.b16 %v1713, %v1712
    %v1726 = vpack.c.b16 %v1715, %v1714
    %v1727 = vpack.c.b16 %v1717, %v1716
    %v1728 = vpack.c.b16 %v1719, %v1718
    %v1729 = vpack.c.b16 %v1721, %v1720
    %1738 = vmatprep.subr.bf16.mxu0 0
    %1739 = vmatpush1.bf16.msra.mxu0 %v1722
    %1740 = vmatprep.subr.bf16.mxu0 0
    %1741 = vmatpush1.bf16.msra.mxu0 %v1723
    %1742 = vmatprep.subr.bf16.mxu0 0
    %1743 = vmatpush1.bf16.msra.mxu0 %v1724
    %1744 = vmatprep.subr.bf16.mxu0 0
    %1745 = vmatpush1.bf16.msra.mxu0 %v1725
    %1746 = vmatprep.subr.bf16.mxu0 0
    %1747 = vmatpush1.bf16.msra.mxu0 %v1726
    %1748 = vmatprep.subr.bf16.mxu0 0
    %1749 = vmatpush1.bf16.msra.mxu0 %v1727
    %1750 = vmatprep.subr.bf16.mxu0 0
    %1751 = vmatpush1.bf16.msra.mxu0 %v1728
    %1752 = vmatprep.subr.bf16.mxu0 0
    %1753 = vmatpush1.bf16.msra.mxu0 %v1729
    %1754 = vmatprep.subr.bf16.mxu0 0
    %1755 = vmatpush1.bf16.msra.mxu0 0
    %1756 = vmatprep.subr.bf16.mxu0 0
    %1757 = vmatpush1.bf16.msra.mxu0 0
    %1758 = vmatprep.subr.bf16.mxu0 0
    %1759 = vmatpush1.bf16.msra.mxu0 0
    %1760 = vmatprep.subr.bf16.mxu0 0
    %1761 = vmatpush1.bf16.msra.mxu0 0
    %1762 = vmatprep.subr.bf16.mxu0 0
    %1763 = vmatpush1.bf16.msra.mxu0 0
    %1764 = vmatprep.subr.bf16.mxu0 0
    %1765 = vmatpush1.bf16.msra.mxu0 0
    %1766 = vmatprep.subr.bf16.mxu0 0
    %1767 = vmatpush1.bf16.msra.mxu0 0
    %1768 = vmatprep.subr.bf16.mxu0 0
    %1769 = vmatpush1.bf16.msra.mxu0 0
    %1770 = vmatprep.mubr.bf16.mxu0 0
    %1771 = vmatmul.mubr.bf16.gmra.mrb[0].mxu0 %v1664
    %v1772 = vpop.f32.mrb[0].mxu0
    %v1773 = vadd.f32 %v1688, %v1772
    %v1774 = vpop.f32.mrb[0].mxu0
    %v1775 = vpop.f32.mrb[0].mxu0
    %v1776 = vadd.f32 %v1688, %v1775
    %v1777 = vpop.f32.mrb[0].mxu0
    %1778 = vdwg.mxu0
    %v1779 = vtanh.pop %v1773
    %v1780 = vtanh.pop %v1776
    %v1781 = vpack.c.bf16 %v1780, %v1779
    %s1782 = scalar_lea.vmem [#allocation8], 320
    %v1783 = vld [vmem:[%s1782] sm:$0xf]
    %v1784 = vld [vmem:[%s1782 + $0x4] sm:$0xf]
    %v1785 = vld [vmem:[%s1782 + $0x8] sm:$0xf]
    %v1786 = vld [vmem:[%s1782 + $0xc] sm:$0xf]
    %v1787 = vld [vmem:[%s1782 + $0x10] sm:$0xf]
    %v1788 = vld [vmem:[%s1782 + $0x14] sm:$0xf]
    %v1789 = vld [vmem:[%s1782 + $0x18] sm:$0xf]
    %v1790 = vld [vmem:[%s1782 + $0x1c] sm:$0xf]
    %v1791 = vld [vmem:[%s1782 + $0x20] sm:$0xf]
    %v1792 = vld [vmem:[%s1782 + $0x24] sm:$0xf]
    %v1793 = vld [vmem:[%s1782 + $0x28] sm:$0xf]
    %v1794 = vld [vmem:[%s1782 + $0x2c] sm:$0xf]
    %v1795 = vld [vmem:[%s1782 + $0x30] sm:$0xf]
    %v1796 = vld [vmem:[%s1782 + $0x34] sm:$0xf]
    %v1797 = vld [vmem:[%s1782 + $0x38] sm:$0xf]
    %v1798 = vld [vmem:[%s1782 + $0x3c] sm:$0xf]
    %s1799 = scalar_lea.vmem %s6, 5
    %v1800 = vld [vmem:[%s1799] sm:$0x1]
    %v1802 = vlaneseq
    %v1803 = vshrl.u32 %v1802, 7
    %v1804 = vsub.s32 0, %v1803
    %v1805 = vrot.slane %v1800, %v1804
    %v1823 = vunpack.c.l.b16 %v1783
    %v1824 = vunpack.c.l.b16 %v1784
    %v1825 = vunpack.c.l.b16 %v1785
    %v1826 = vunpack.c.l.b16 %v1786
    %v1827 = vunpack.c.l.b16 %v1787
    %v1828 = vunpack.c.l.b16 %v1788
    %v1829 = vunpack.c.l.b16 %v1789
    %v1830 = vunpack.c.l.b16 %v1790
    %v1831 = vunpack.c.l.b16 %v1791
    %v1832 = vunpack.c.l.b16 %v1792
    %v1833 = vunpack.c.l.b16 %v1793
    %v1834 = vunpack.c.l.b16 %v1794
    %v1835 = vunpack.c.l.b16 %v1795
    %v1836 = vunpack.c.l.b16 %v1796
    %v1837 = vunpack.c.l.b16 %v1797
    %v1838 = vunpack.c.l.b16 %v1798
    %v1839 = vpack.c.b16 %v1824, %v1823
    %v1840 = vpack.c.b16 %v1826, %v1825
    %v1841 = vpack.c.b16 %v1828, %v1827
    %v1842 = vpack.c.b16 %v1830, %v1829
    %v1843 = vpack.c.b16 %v1832, %v1831
    %v1844 = vpack.c.b16 %v1834, %v1833
    %v1845 = vpack.c.b16 %v1836, %v1835
    %v1846 = vpack.c.b16 %v1838, %v1837
    %1855 = vmatprep.subr.bf16.mxu0 0
    %1856 = vmatpush1.bf16.msra.mxu0 %v1839
    %1857 = vmatprep.subr.bf16.mxu0 0
    %1858 = vmatpush1.bf16.msra.mxu0 %v1840
    %1859 = vmatprep.subr.bf16.mxu0 0
    %1860 = vmatpush1.bf16.msra.mxu0 %v1841
    %1861 = vmatprep.subr.bf16.mxu0 0
    %1862 = vmatpush1.bf16.msra.mxu0 %v1842
    %1863 = vmatprep.subr.bf16.mxu0 0
    %1864 = vmatpush1.bf16.msra.mxu0 %v1843
    %1865 = vmatprep.subr.bf16.mxu0 0
    %1866 = vmatpush1.bf16.msra.mxu0 %v1844
    %1867 = vmatprep.subr.bf16.mxu0 0
    %1868 = vmatpush1.bf16.msra.mxu0 %v1845
    %1869 = vmatprep.subr.bf16.mxu0 0
    %1870 = vmatpush1.bf16.msra.mxu0 %v1846
    %1871 = vmatprep.subr.bf16.mxu0 0
    %1872 = vmatpush1.bf16.msra.mxu0 0
    %1873 = vmatprep.subr.bf16.mxu0 0
    %1874 = vmatpush1.bf16.msra.mxu0 0
    %1875 = vmatprep.subr.bf16.mxu0 0
    %1876 = vmatpush1.bf16.msra.mxu0 0
    %1877 = vmatprep.subr.bf16.mxu0 0
    %1878 = vmatpush1.bf16.msra.mxu0 0
    %1879 = vmatprep.subr.bf16.mxu0 0
    %1880 = vmatpush1.bf16.msra.mxu0 0
    %1881 = vmatprep.subr.bf16.mxu0 0
    %1882 = vmatpush1.bf16.msra.mxu0 0
    %1883 = vmatprep.subr.bf16.mxu0 0
    %1884 = vmatpush1.bf16.msra.mxu0 0
    %1885 = vmatprep.subr.bf16.mxu0 0
    %1886 = vmatpush1.bf16.msra.mxu0 0
    %1887 = vmatprep.mubr.bf16.mxu0 0
    %1888 = vmatmul.mubr.bf16.gmra.mrb[0].mxu0 %v1781
    %v1889 = vpop.f32.mrb[0].mxu0
    %v1890 = vadd.f32 %v1805, %v1889
    %v1891 = vpop.f32.mrb[0].mxu0
    %v1892 = vpop.f32.mrb[0].mxu0
    %v1893 = vadd.f32 %v1805, %v1892
    %v1894 = vpop.f32.mrb[0].mxu0
    %1895 = vdwg.mxu0
    %v1896 = vand.u32 2147483647, %v1890
    %v1897 = vand.u32 2147483647, %v1893
    %v1898 = vsub.f32 0.0, %v1896
    %v1899 = vsub.f32 0.0, %v1897
    %v1900 = vmul.f32 %v1898, 1.442695
    %v1901 = vpow.pop %v1900
    %v1902 = vmul.f32 %v1899, 1.442695
    %v1903 = vpow.pop %v1902
    %v1904 = vadd.f32 %v1901, 1.0
    %v1905 = vadd.f32 %v1903, 1.0
    %v1906 = vrcp.pop %v1904
    %v1907 = vrcp.pop %v1905
    %vm1908 = vcmp.ge.f32.partialorder %v1890, 0.0
    %vm1909 = vcmp.ge.f32.partialorder %v1893, 0.0
    %v1910 = vmul.f32 %v1901, %v1906
    %v1911 = vmul.f32 %v1903, %v1907
    %v1912 = vsel %vm1908, %v1906, %v1910
    %v1913 = vsel %vm1909, %v1907, %v1911
    %1914 = vst [vmem:[#allocation11 + $0x10] sm:$0xff] %v1912
    %1915 = vst [vmem:[#allocation11 + $0x28] sm:$0xff] %v1913
    %s1916 = scalar_lea.vmem [#allocation5], 48
    %v1917 = vld [vmem:[%s1916] sm:$0xf]
    %v1918 = vld [vmem:[%s1916 + $0x4] sm:$0xf]
    %s1919 = scalar_lea.vmem %s2, 6
    %v1920 = vld [vmem:[%s1919] sm:$0x1]
    %v1922 = vlaneseq
    %v1923 = vshrl.u32 %v1922, 7
    %v1924 = vsub.s32 0, %v1923
    %v1925 = vrot.slane %v1920, %v1924
    %v1929 = vunpack.c.l.b16 %v1917
    %v1930 = vunpack.c.l.b16 %v1918
    %v1931 = vpack.c.b16 %v1930, %v1929
    %1933 = vmatprep.subr.bf16.mxu0 0
    %1934 = vmatpush1.bf16.msra.mxu0 %v1931
    %1935 = vmatprep.subr.bf16.mxu0 0
    %1936 = vmatpush1.bf16.msra.mxu0 0
    %1937 = vmatprep.subr.bf16.mxu0 0
    %1938 = vmatpush1.bf16.msra.mxu0 0
    %1939 = vmatprep.subr.bf16.mxu0 0
    %1940 = vmatpush1.bf16.msra.mxu0 0
    %1941 = vmatprep.subr.bf16.mxu0 0
    %1942 = vmatpush1.bf16.msra.mxu0 0
    %1943 = vmatprep.subr.bf16.mxu0 0
    %1944 = vmatpush1.bf16.msra.mxu0 0
    %1945 = vmatprep.subr.bf16.mxu0 0
    %1946 = vmatpush1.bf16.msra.mxu0 0
    %1947 = vmatprep.subr.bf16.mxu0 0
    %1948 = vmatpush1.bf16.msra.mxu0 0
    %1949 = vmatprep.subr.bf16.mxu0 0
    %1950 = vmatpush1.bf16.msra.mxu0 0
    %1951 = vmatprep.subr.bf16.mxu0 0
    %1952 = vmatpush1.bf16.msra.mxu0 0
    %1953 = vmatprep.subr.bf16.mxu0 0
    %1954 = vmatpush1.bf16.msra.mxu0 0
    %1955 = vmatprep.subr.bf16.mxu0 0
    %1956 = vmatpush1.bf16.msra.mxu0 0
    %1957 = vmatprep.subr.bf16.mxu0 0
    %1958 = vmatpush1.bf16.msra.mxu0 0
    %1959 = vmatprep.subr.bf16.mxu0 0
    %1960 = vmatpush1.bf16.msra.mxu0 0
    %1961 = vmatprep.subr.bf16.mxu0 0
    %1962 = vmatpush1.bf16.msra.mxu0 0
    %1963 = vmatprep.subr.bf16.mxu0 0
    %1964 = vmatpush1.bf16.msra.mxu0 0
    %1965 = vmatprep.mubr.bf16.mxu0 0
    %1966 = vmatmul.mubr.bf16.gmra.mrb[0].mxu0 %v111
    %v1967 = vpop.f32.mrb[0].mxu0
    %v1968 = vadd.f32 %v1925, %v1967
    %v1969 = vpop.f32.mrb[0].mxu0
    %v1970 = vpop.f32.mrb[0].mxu0
    %v1971 = vadd.f32 %v1925, %v1970
    %v1972 = vpop.f32.mrb[0].mxu0
    %1973 = vdwg.mxu0
    %v1974 = vtanh.pop %v1968
    %v1975 = vtanh.pop %v1971
    %v1976 = vpack.c.bf16 %v1975, %v1974
    %s1977 = scalar_lea.vmem [#allocation7], 384
    %v1978 = vld [vmem:[%s1977] sm:$0xf]
    %v1979 = vld [vmem:[%s1977 + $0x4] sm:$0xf]
    %v1980 = vld [vmem:[%s1977 + $0x8] sm:$0xf]
    %v1981 = vld [vmem:[%s1977 + $0xc] sm:$0xf]
    %v1982 = vld [vmem:[%s1977 + $0x10] sm:$0xf]
    %v1983 = vld [vmem:[%s1977 + $0x14] sm:$0xf]
    %v1984 = vld [vmem:[%s1977 + $0x18] sm:$0xf]
    %v1985 = vld [vmem:[%s1977 + $0x1c] sm:$0xf]
    %v1986 = vld [vmem:[%s1977 + $0x20] sm:$0xf]
    %v1987 = vld [vmem:[%s1977 + $0x24] sm:$0xf]
    %v1988 = vld [vmem:[%s1977 + $0x28] sm:$0xf]
    %v1989 = vld [vmem:[%s1977 + $0x2c] sm:$0xf]
    %v1990 = vld [vmem:[%s1977 + $0x30] sm:$0xf]
    %v1991 = vld [vmem:[%s1977 + $0x34] sm:$0xf]
    %v1992 = vld [vmem:[%s1977 + $0x38] sm:$0xf]
    %v1993 = vld [vmem:[%s1977 + $0x3c] sm:$0xf]
    %s1994 = scalar_lea.vmem %s4, 6
    %v1995 = vld [vmem:[%s1994] sm:$0x1]
    %v1997 = vlaneseq
    %v1998 = vshrl.u32 %v1997, 7
    %v1999 = vsub.s32 0, %v1998
    %v2000 = vrot.slane %v1995, %v1999
    %v2018 = vunpack.c.l.b16 %v1978
    %v2019 = vunpack.c.l.b16 %v1979
    %v2020 = vunpack.c.l.b16 %v1980
    %v2021 = vunpack.c.l.b16 %v1981
    %v2022 = vunpack.c.l.b16 %v1982
    %v2023 = vunpack.c.l.b16 %v1983
    %v2024 = vunpack.c.l.b16 %v1984
    %v2025 = vunpack.c.l.b16 %v1985
    %v2026 = vunpack.c.l.b16 %v1986
    %v2027 = vunpack.c.l.b16 %v1987
    %v2028 = vunpack.c.l.b16 %v1988
    %v2029 = vunpack.c.l.b16 %v1989
    %v2030 = vunpack.c.l.b16 %v1990
    %v2031 = vunpack.c.l.b16 %v1991
    %v2032 = vunpack.c.l.b16 %v1992
    %v2033 = vunpack.c.l.b16 %v1993
    %v2034 = vpack.c.b16 %v2019, %v2018
    %v2035 = vpack.c.b16 %v2021, %v2020
    %v2036 = vpack.c.b16 %v2023, %v2022
    %v2037 = vpack.c.b16 %v2025, %v2024
    %v2038 = vpack.c.b16 %v2027, %v2026
    %v2039 = vpack.c.b16 %v2029, %v2028
    %v2040 = vpack.c.b16 %v2031, %v2030
    %v2041 = vpack.c.b16 %v2033, %v2032
    %2050 = vmatprep.subr.bf16.mxu0 0
    %2051 = vmatpush1.bf16.msra.mxu0 %v2034
    %2052 = vmatprep.subr.bf16.mxu0 0
    %2053 = vmatpush1.bf16.msra.mxu0 %v2035
    %2054 = vmatprep.subr.bf16.mxu0 0
    %2055 = vmatpush1.bf16.msra.mxu0 %v2036
    %2056 = vmatprep.subr.bf16.mxu0 0
    %2057 = vmatpush1.bf16.msra.mxu0 %v2037
    %2058 = vmatprep.subr.bf16.mxu0 0
    %2059 = vmatpush1.bf16.msra.mxu0 %v2038
    %2060 = vmatprep.subr.bf16.mxu0 0
    %2061 = vmatpush1.bf16.msra.mxu0 %v2039
    %2062 = vmatprep.subr.bf16.mxu0 0
    %2063 = vmatpush1.bf16.msra.mxu0 %v2040
    %2064 = vmatprep.subr.bf16.mxu0 0
    %2065 = vmatpush1.bf16.msra.mxu0 %v2041
    %2066 = vmatprep.subr.bf16.mxu0 0
    %2067 = vmatpush1.bf16.msra.mxu0 0
    %2068 = vmatprep.subr.bf16.mxu0 0
    %2069 = vmatpush1.bf16.msra.mxu0 0
    %2070 = vmatprep.subr.bf16.mxu0 0
    %2071 = vmatpush1.bf16.msra.mxu0 0
    %2072 = vmatprep.subr.bf16.mxu0 0
    %2073 = vmatpush1.bf16.msra.mxu0 0
    %2074 = vmatprep.subr.bf16.mxu0 0
    %2075 = vmatpush1.bf16.msra.mxu0 0
    %2076 = vmatprep.subr.bf16.mxu0 0
    %2077 = vmatpush1.bf16.msra.mxu0 0
    %2078 = vmatprep.subr.bf16.mxu0 0
    %2079 = vmatpush1.bf16.msra.mxu0 0
    %2080 = vmatprep.subr.bf16.mxu0 0
    %2081 = vmatpush1.bf16.msra.mxu0 0
    %2082 = vmatprep.mubr.bf16.mxu0 0
    %2083 = vmatmul.mubr.bf16.gmra.mrb[0].mxu0 %v1976
    %v2084 = vpop.f32.mrb[0].mxu0
    %v2085 = vadd.f32 %v2000, %v2084
    %v2086 = vpop.f32.mrb[0].mxu0
    %v2087 = vpop.f32.mrb[0].mxu0
    %v2088 = vadd.f32 %v2000, %v2087
    %v2089 = vpop.f32.mrb[0].mxu0
    %2090 = vdwg.mxu0
    %v2091 = vtanh.pop %v2085
    %v2092 = vtanh.pop %v2088
    %v2093 = vpack.c.bf16 %v2092, %v2091
    %s2094 = scalar_lea.vmem [#allocation8], 384
    %v2095 = vld [vmem:[%s2094] sm:$0xf]
    %v2096 = vld [vmem:[%s2094 + $0x4] sm:$0xf]
    %v2097 = vld [vmem:[%s2094 + $0x8] sm:$0xf]
    %v2098 = vld [vmem:[%s2094 + $0xc] sm:$0xf]
    %v2099 = vld [vmem:[%s2094 + $0x10] sm:$0xf]
    %v2100 = vld [vmem:[%s2094 + $0x14] sm:$0xf]
    %v2101 = vld [vmem:[%s2094 + $0x18] sm:$0xf]
    %v2102 = vld [vmem:[%s2094 + $0x1c] sm:$0xf]
    %v2103 = vld [vmem:[%s2094 + $0x20] sm:$0xf]
    %v2104 = vld [vmem:[%s2094 + $0x24] sm:$0xf]
    %v2105 = vld [vmem:[%s2094 + $0x28] sm:$0xf]
    %v2106 = vld [vmem:[%s2094 + $0x2c] sm:$0xf]
    %v2107 = vld [vmem:[%s2094 + $0x30] sm:$0xf]
    %v2108 = vld [vmem:[%s2094 + $0x34] sm:$0xf]
    %v2109 = vld [vmem:[%s2094 + $0x38] sm:$0xf]
    %v2110 = vld [vmem:[%s2094 + $0x3c] sm:$0xf]
    %s2111 = scalar_lea.vmem %s6, 6
    %v2112 = vld [vmem:[%s2111] sm:$0x1]
    %v2114 = vlaneseq
    %v2115 = vshrl.u32 %v2114, 7
    %v2116 = vsub.s32 0, %v2115
    %v2117 = vrot.slane %v2112, %v2116
    %v2135 = vunpack.c.l.b16 %v2095
    %v2136 = vunpack.c.l.b16 %v2096
    %v2137 = vunpack.c.l.b16 %v2097
    %v2138 = vunpack.c.l.b16 %v2098
    %v2139 = vunpack.c.l.b16 %v2099
    %v2140 = vunpack.c.l.b16 %v2100
    %v2141 = vunpack.c.l.b16 %v2101
    %v2142 = vunpack.c.l.b16 %v2102
    %v2143 = vunpack.c.l.b16 %v2103
    %v2144 = vunpack.c.l.b16 %v2104
    %v2145 = vunpack.c.l.b16 %v2105
    %v2146 = vunpack.c.l.b16 %v2106
    %v2147 = vunpack.c.l.b16 %v2107
    %v2148 = vunpack.c.l.b16 %v2108
    %v2149 = vunpack.c.l.b16 %v2109
    %v2150 = vunpack.c.l.b16 %v2110
    %v2151 = vpack.c.b16 %v2136, %v2135
    %v2152 = vpack.c.b16 %v2138, %v2137
    %v2153 = vpack.c.b16 %v2140, %v2139
    %v2154 = vpack.c.b16 %v2142, %v2141
    %v2155 = vpack.c.b16 %v2144, %v2143
    %v2156 = vpack.c.b16 %v2146, %v2145
    %v2157 = vpack.c.b16 %v2148, %v2147
    %v2158 = vpack.c.b16 %v2150, %v2149
    %2167 = vmatprep.subr.bf16.mxu0 0
    %2168 = vmatpush1.bf16.msra.mxu0 %v2151
    %2169 = vmatprep.subr.bf16.mxu0 0
    %2170 = vmatpush1.bf16.msra.mxu0 %v2152
    %2171 = vmatprep.subr.bf16.mxu0 0
    %2172 = vmatpush1.bf16.msra.mxu0 %v2153
    %2173 = vmatprep.subr.bf16.mxu0 0
    %2174 = vmatpush1.bf16.msra.mxu0 %v2154
    %2175 = vmatprep.subr.bf16.mxu0 0
    %2176 = vmatpush1.bf16.msra.mxu0 %v2155
    %2177 = vmatprep.subr.bf16.mxu0 0
    %2178 = vmatpush1.bf16.msra.mxu0 %v2156
    %2179 = vmatprep.subr.bf16.mxu0 0
    %2180 = vmatpush1.bf16.msra.mxu0 %v2157
    %2181 = vmatprep.subr.bf16.mxu0 0
    %2182 = vmatpush1.bf16.msra.mxu0 %v2158
    %2183 = vmatprep.subr.bf16.mxu0 0
    %2184 = vmatpush1.bf16.msra.mxu0 0
    %2185 = vmatprep.subr.bf16.mxu0 0
    %2186 = vmatpush1.bf16.msra.mxu0 0
    %2187 = vmatprep.subr.bf16.mxu0 0
    %2188 = vmatpush1.bf16.msra.mxu0 0
    %2189 = vmatprep.subr.bf16.mxu0 0
    %2190 = vmatpush1.bf16.msra.mxu0 0
    %2191 = vmatprep.subr.bf16.mxu0 0
    %2192 = vmatpush1.bf16.msra.mxu0 0
    %2193 = vmatprep.subr.bf16.mxu0 0
    %2194 = vmatpush1.bf16.msra.mxu0 0
    %2195 = vmatprep.subr.bf16.mxu0 0
    %2196 = vmatpush1.bf16.msra.mxu0 0
    %2197 = vmatprep.subr.bf16.mxu0 0
    %2198 = vmatpush1.bf16.msra.mxu0 0
    %2199 = vmatprep.mubr.bf16.mxu0 0
    %2200 = vmatmul.mubr.bf16.gmra.mrb[0].mxu0 %v2093
    %v2201 = vpop.f32.mrb[0].mxu0
    %v2202 = vadd.f32 %v2117, %v2201
    %v2203 = vpop.f32.mrb[0].mxu0
    %v2204 = vpop.f32.mrb[0].mxu0
    %v2205 = vadd.f32 %v2117, %v2204
    %v2206 = vpop.f32.mrb[0].mxu0
    %2207 = vdwg.mxu0
    %v2208 = vlaneseq
    %v2209 = vand.u32 %v2208, 127
    %vm2210 = vcmp.lt.s32.totalorder %v2209, 3
    %v2211 = vsel %vm2210, %v2202, -1e+30
    %v2212 = vsel %vm2210, %v2205, -1e+30
    %2213 = vmax.xlane.f32.xlu0 %v2211
    %v2214 = vpop.xlane.xlu0 %2213
    %2215 = vmax.xlane.f32.xlu0 %v2212
    %v2216 = vpop.xlane.xlu0 %2215
    %v2217 = vsub.f32 %v2211, %v2214
    %v2218 = vsub.f32 %v2212, %v2216
    %v2219 = vmul.f32 %v2217, 1.442695
    %v2220 = vpow.pop %v2219
    %v2221 = vmul.f32 %v2218, 1.442695
    %v2222 = vpow.pop %v2221
    %2223 = vadd.xlane.f32.xlu0 %v2220
    %v2224 = vpop.xlane.xlu0 %2223
    %2225 = vadd.xlane.f32.xlu0 %v2222
    %v2226 = vpop.xlane.xlu0 %2225
    %v2227 = vrcp.pop %v2224
    %v2228 = vrcp.pop %v2226
    %v2229 = vmul.f32 %v2220, %v2227
    %v2230 = vmul.f32 %v2222, %v2228
    %2231 = vst [vmem:[#allocation13] sm:$0xff] %v2229
    %2232 = vst [vmem:[#allocation13 + $0x8] sm:$0xff] %v2230
    // Predicated region
    $region46: #{tpu_custom_call.1} parent=1 // pred_check
      _
    $region47: #{tpu_custom_call.1} parent=1 // pred_check_branch
      %2234 = sbr.rel (0) target = $region49
    $region48: #{tpu_custom_call.1} parent=1 // pred_region
      %s2236 = ssub.s32 768, 768
      %2237 = vsyncadd [#allocation4], %s2236
      %s2238 = sshll.u32 [#allocation10], 4
      %s2239 = int_to_ptr.vmem [resolvable:$true] %s2238
      %2244 = dma.vmem_to_hbm [thread:$0]  %s2239, 768, %s7, [#allocation4], 384, 384, 24
    $region49: #{tpu_custom_call.1} parent=1 // pred_fallthru
      _
    // Predicated region
    $region50: #{tpu_custom_call.1} parent=1 // pred_check
      _
    $region51: #{tpu_custom_call.1} parent=1 // pred_check_branch
      %2246 = sbr.rel (0) target = $region53
    $region52: #{tpu_custom_call.1} parent=1 // pred_region
      %s2248 = ssub.s32 768, 768
      %2249 = vsyncadd [#allocation12], %s2248
      %s2250 = sshll.u32 [#allocation11], 4
      %s2251 = int_to_ptr.vmem [resolvable:$true] %s2250
      %2256 = dma.vmem_to_hbm [thread:$0]  %s2251, 768, %s8, [#allocation12], 384, 384, 24
    $region53: #{tpu_custom_call.1} parent=1 // pred_fallthru
      _
    // Predicated region
    $region54: #{tpu_custom_call.1} parent=1 // pred_check
      _
    $region55: #{tpu_custom_call.1} parent=1 // pred_check_branch
      %2258 = sbr.rel (0) target = $region57
    $region56: #{tpu_custom_call.1} parent=1 // pred_region
      %s2260 = ssub.s32 256, 256
      %2261 = vsyncadd [#allocation12], %s2260
      %s2262 = sshll.u32 [#allocation13], 4
      %s2263 = int_to_ptr.vmem [resolvable:$true] %s2262
      %2268 = dma.vmem_to_hbm [thread:$0]  %s2263, 256, %s9, [#allocation12], 128, 128, 8
    $region57: #{tpu_custom_call.1} parent=1 // pred_fallthru
      _
    // Predicated region
    $region58: #{tpu_custom_call.1} parent=1 // pred_check
      _
    $region59: #{tpu_custom_call.1} parent=1 // pred_check_branch
      %2270 = sbr.rel (0) target = $region61
    $region60: #{tpu_custom_call.1} parent=1 // pred_region
      %2271 = dma.done [#allocation4], 768
    $region61: #{tpu_custom_call.1} parent=1 // pred_fallthru
      _
    // Predicated region
    $region62: #{tpu_custom_call.1} parent=1 // pred_check
      _
    $region63: #{tpu_custom_call.1} parent=1 // pred_check_branch
      %2273 = sbr.rel (0) target = $region65
    $region64: #{tpu_custom_call.1} parent=1 // pred_region
      %2274 = dma.done [#allocation12], 768
    $region65: #{tpu_custom_call.1} parent=1 // pred_fallthru
      _
    // Predicated region
    $region66: #{tpu_custom_call.1} parent=1 // pred_check
      _
    $region67: #{tpu_custom_call.1} parent=1 // pred_check_branch
      %2276 = sbr.rel (0) target = $region69
    $region68: #{tpu_custom_call.1} parent=1 // pred_region
      %2277 = dma.done [#allocation12], 256
    $region69: #{tpu_custom_call.1} parent=1 // pred_fallthru
      _
    %2278 = vsyncpa [#allocation3], 1
    %2279 = vsyncpa [#allocation6], 1
    %2280 = vsyncpa [#allocation9], 1
    %2281 = vsyncpa [#allocation4], 1
    %2282 = vsyncpa [#allocation12], 1

</llo_original>
